<compile_context>
chip_gen: v5e
topology: v5e:2x2
jax: 0.10.0
libtpu: 0.0.40
codegen_flags: <defaults>
</compile_context>

<pallas_src>
import functools

import jax
import jax.numpy as jnp
from jax.experimental import pallas as pl
from jax.experimental.pallas import tpu as pltpu

_EPS = 1e-5


def _round_up(x, m):
    return (x + m - 1) // m * m


def _device_kind():
    try:
        return jax.devices()[0].device_kind.lower()
    except Exception:
        return ""


def _vmem_limit_bytes(kind):
    # v5e/v6e: 128 MiB physical VMEM -> 64 MiB scoped is safe; v7x: 64 MiB per TC -> 48 MiB.
    return (48 if "v7" in kind else 64) * 1024 * 1024


def _num_stats_cores(kind):
    # v7x has 2 TensorCores per chip: split the stats accumulation across them.
    return 2 if "v7" in kind else 1


def _pick_tile_e(hidden, vmem_limit):
    """Edge-tile size from H and the VMEM budget (big tiles amortize grid-step overhead)."""
    c1p = _round_up(4 * hidden, 128)
    c2p = _round_up(max(hidden, 1), 128)
    per_edge = 4 * (4 * c1p + 4 * c2p) + 4 * (2 * hidden)   # rough f32 footprint / edge
    te = (vmem_limit // 3) // max(per_edge, 1)
    te = max(512, min(te, 4096))
    return (te // 128) * 128


# ---------------------------------------------------------------------------
# In-kernel helpers (traced inside the Pallas kernels below).
# ---------------------------------------------------------------------------

def _onehot_graph_by_edge(eb_ref, g_pad):
    """(1,1,te) int32 graph ids -> (g_pad, te) f32 one-hot (graphs=sublanes, edges=lanes)."""
    eb = eb_ref[0]                                                   # (1, te) int32
    gids = jax.lax.broadcasted_iota(jnp.int32, (g_pad, eb.shape[-1]), 0)
    return (gids == eb).astype(jnp.float32)


def _layer1_pre(ef_ref, w1_ref, b1_ref):
    """Linear(2H->4H): single MXU dot with K=2H on the (te, 2H) bf16 edge features."""
    return (jnp.dot(ef_ref[...], w1_ref[...], preferred_element_type=jnp.float32)
            + b1_ref[...])


def _accumulate_moments(mom_ref, oh_ge, h):
    """Accumulate per-graph [sum(h) | sum(h*h)] into the core-resident (1, G, 2C) output."""
    @pl.when(pl.program_id(1) == 0)
    def _init():
        mom_ref[...] = jnp.zeros_like(mom_ref)

    c = h.shape[-1]
    # Two reduce matmuls sharing the one-hot LHS; natural contraction axes, no lane concat.
    mom_ref[0, :, :c] += jnp.dot(oh_ge, h, preferred_element_type=jnp.float32)
    mom_ref[0, :, c:] += jnp.dot(oh_ge, h * h, preferred_element_type=jnp.float32)


def _norm_relu(h, oh_ge, ns):
    """InstanceNorm + ReLU.  ns: (G, 2C) = [mean | 1/sqrt(var+eps)], broadcast via matmul."""
    c = h.shape[-1]
    per_edge = jax.lax.dot_general(oh_ge, ns, (((0,), (0,)), ((), ())),
                                   preferred_element_type=jnp.float32)   # (te, 2C)
    return jnp.maximum((h - per_edge[:, :c]) * per_edge[:, c:], 0.0)


# ---------------------------------------------------------------------------
# Kernels.
# ---------------------------------------------------------------------------

def _stats1_kernel(ef_ref, eb_ref, w1_ref, b1_ref, mom1_ref):
    oh = _onehot_graph_by_edge(eb_ref, mom1_ref.shape[1])
    h1p = _layer1_pre(ef_ref, w1_ref, b1_ref)
    _accumulate_moments(mom1_ref, oh, h1p)


def _stats2_kernel(ef_ref, eb_ref, w1_ref, b1_ref, ns1_ref, w2_ref, b2_ref, mom2_ref):
    oh = _onehot_graph_by_edge(eb_ref, ns1_ref.shape[0])
    h1 = _norm_relu(_layer1_pre(ef_ref, w1_ref, b1_ref), oh, ns1_ref[...])
    h2p = (jnp.dot(h1.astype(jnp.bfloat16), w2_ref[...],
                   preferred_element_type=jnp.float32) + b2_ref[...])
    _accumulate_moments(mom2_ref, oh, h2p)


def _apply_kernel(ef_ref, eb_ref, w1_ref, b1_ref, ns1_ref, w2_ref, b2_ref,
                  ns2_ref, w3_ref, b3_ref, out_ref):
    oh = _onehot_graph_by_edge(eb_ref, ns1_ref.shape[0])
    h1 = _norm_relu(_layer1_pre(ef_ref, w1_ref, b1_ref), oh, ns1_ref[...])
    h2p = (jnp.dot(h1.astype(jnp.bfloat16), w2_ref[...],
                   preferred_element_type=jnp.float32) + b2_ref[...])
    h2 = _norm_relu(h2p, oh, ns2_ref[...])
    # Final Linear(H->1): contract w3 (1, C2p) with h2 (te, C2p) on the channel axis
    # -> lane-dense (1, te) row => unmasked full-lane stores.
    logits = jax.lax.dot_general(w3_ref[...], h2, (((1,), (1,)), ((), ())),
                                 preferred_element_type=jnp.float32)
    out_ref[0] = logits + b3_ref[0, 0]


# ---------------------------------------------------------------------------
# Wrapper.
# ---------------------------------------------------------------------------

def _norm_stats_from_moments(moments, counts):
    """(G, 2C) [sum|sum^2] -> (G, 2C) [mean|rstd]; fused biased variance in f32."""
    c = moments.shape[1] // 2
    mean = moments[:, :c] / counts
    var = jnp.maximum(moments[:, c:] / counts - mean * mean, 0.0)
    rstd = jax.lax.rsqrt(var + _EPS)
    return jnp.concatenate([mean, rstd], axis=-1)


@functools.partial(jax.jit,
                   static_argnames=("num_graphs", "tile_e", "num_cores", "vmem_limit"))
def _forward_impl(emb, edge_index, batch, params, *, num_graphs, tile_e, num_cores,
                  vmem_limit):
    w1, b1, w2, b2, w3, b3 = params
    H = emb.shape[1]
    C1 = w1.shape[1]                     # 4H
    C2 = w2.shape[1]                     # H
    C1p = _round_up(C1, 128)
    C2p = _round_up(C2, 128)
    E = edge_index.shape[1]

    col, row = edge_index[0], edge_index[1]
    edge_batch = batch[col].astype(jnp.int32)

    # Glue (data-dependent gathers) stays in XLA; a single (E, 2H) bf16 stream + unsplit
    # w1 replaces the two (E, H) streams (one K=2H dot, half the DMA descriptors).
    ef = jnp.concatenate([emb[col], emb[row]], axis=-1).astype(jnp.bfloat16)   # (E, 2H)

    g_pad = _round_up(max(num_graphs, 1), 8)

    te = max(128, (min(tile_e, _round_up(E, 128)) // 128) * 128)
    tiles = -(-E // te)
    ncore = max(1, min(num_cores, tiles))
    tpc = -(-tiles // ncore)             # tiles per core
    num_tiles = tpc * ncore
    e_pad = num_tiles * te
    pad = e_pad - E

    ef = jnp.pad(ef, ((0, pad), (0, 0)))
    # Padded edges carry the sentinel graph id g_pad (outside the iota range [0, g_pad)),
    # so their one-hot rows are all-zero and they contribute nothing to per-graph stats;
    # their outputs are sliced off below.
    eb = jnp.pad(edge_batch, (0, pad), constant_values=g_pad)
    eb = eb.reshape(num_tiles, 1, te)                                          # lane-dense

    # Parameters: zero-padded to 128-lane widths (zero columns normalize to exactly 0 and
    # contribute nothing downstream); MXU operands bf16, biases / norm math f32.
    w1p = jnp.pad(w1, ((0, 0), (0, C1p - C1))).astype(jnp.bfloat16)            # (2H, C1p)
    b1p = jnp.pad(b1.reshape(1, C1), ((0, 0), (0, C1p - C1))).astype(jnp.float32)
    w2p = jnp.pad(w2, ((0, C1p - C1), (0, C2p - C2))).astype(jnp.bfloat16)     # (C1p, C2p)
    b2p = jnp.pad(b2.reshape(1, C2), ((0, 0), (0, C2p - C2))).astype(jnp.float32)
    w3p = jnp.pad(w3.reshape(1, C2), ((0, 0), (0, C2p - C2))).astype(jnp.float32)
    b3s = b3.reshape(1, 1).astype(jnp.float32)

    # Per-graph edge counts, clamped >= 1 (PyG InstanceNorm semantics).
    counts = jnp.zeros((num_graphs,), jnp.float32).at[edge_batch].add(1.0)
    counts = jnp.maximum(jnp.pad(counts, (0, g_pad - num_graphs)), 1.0)[:, None]

    stats_params = pltpu.CompilerParams(
        dimension_semantics=("parallel", "arbitrary"), vmem_limit_bytes=vmem_limit)
    apply_params = pltpu.CompilerParams(
        dimension_semantics=("parallel",), vmem_limit_bytes=vmem_limit)

    ef_spec2 = pl.BlockSpec((te, 2 * H), lambda c, t: (c * tpc + t, 0))
    eb_spec2 = pl.BlockSpec((1, 1, te), lambda c, t: (c * tpc + t, 0, 0))

    def const2(shape):
        # Constant index_map => block stays VMEM-resident across grid steps (no re-DMA).
        return pl.BlockSpec(shape, lambda c, t: (0,) * len(shape))

    # Pass 1: per-graph [sum | sum of squares] of layer-1 pre-activations.
    moments1 = pl.pallas_call(
        _stats1_kernel,
        grid=(ncore, tpc),
        in_specs=[ef_spec2, eb_spec2, const2((2 * H, C1p)), const2((1, C1p))],
        out_specs=pl.BlockSpec((1, g_pad, 2 * C1p), lambda c, t: (c, 0, 0)),
        out_shape=jax.ShapeDtypeStruct((ncore, g_pad, 2 * C1p), jnp.float32),
        compiler_params=stats_params,
    )(ef, eb, w1p, b1p)
    ns1 = _norm_stats_from_moments(moments1.sum(axis=0), counts)    # (g_pad, 2*C1p)

    # Pass 2: per-graph moments of layer-2 pre-activations (layer 1 recomputed).
    moments2 = pl.pallas_call(
        _stats2_kernel,
        grid=(ncore, tpc),
        in_specs=[ef_spec2, eb_spec2, const2((2 * H, C1p)), const2((1, C1p)),
                  const2((g_pad, 2 * C1p)), const2((C1p, C2p)), const2((1, C2p))],
        out_specs=pl.BlockSpec((1, g_pad, 2 * C2p), lambda c, t: (c, 0, 0)),
        out_shape=jax.ShapeDtypeStruct((ncore, g_pad, 2 * C2p), jnp.float32),
        compiler_params=stats_params,
    )(ef, eb, w1p, b1p, ns1, w2p, b2p)
    ns2 = _norm_stats_from_moments(moments2.sum(axis=0), counts)    # (g_pad, 2*C2p)

    # Pass 3: apply both normalized layers + final Linear(H->1), lane-dense output rows.
    ef_spec1 = pl.BlockSpec((te, 2 * H), lambda t: (t, 0))
    eb_spec1 = pl.BlockSpec((1, 1, te), lambda t: (t, 0, 0))

    def const1(shape):
        return pl.BlockSpec(shape, lambda t: (0,) * len(shape))

    out_tiles = pl.pallas_call(
        _apply_kernel,
        grid=(num_tiles,),
        in_specs=[ef_spec1, eb_spec1, const1((2 * H, C1p)), const1((1, C1p)),
                  const1((g_pad, 2 * C1p)), const1((C1p, C2p)), const1((1, C2p)),
                  const1((g_pad, 2 * C2p)), const1((1, C2p)),
                  pl.BlockSpec(memory_space=pltpu.MemorySpace.SMEM)],
        out_specs=pl.BlockSpec((1, 1, te), lambda t: (t, 0, 0)),
        out_shape=jax.ShapeDtypeStruct((num_tiles, 1, te), jnp.float32),
        compiler_params=apply_params,
    )(ef, eb, w1p, b1p, ns1, w2p, b2p, ns2, w3p, b3s)

    return out_tiles.reshape(e_pad, 1)[:E]                          # (E, 1)


def extractor_mlp_forward(emb, edge_index, batch, params, *, num_graphs, tile_e=None):
    """ExtractorMLP.forward with learn_edge_att=True (eval mode)."""
    kind = _device_kind()
    vmem_limit = _vmem_limit_bytes(kind)
    if tile_e is None:
        tile_e = _pick_tile_e(emb.shape[1], vmem_limit)
    return _forward_impl(emb, edge_index, batch, params, num_graphs=num_graphs,
                         tile_e=tile_e, num_cores=_num_stats_cores(kind),
                         vmem_limit=vmem_limit)


# ---------------------------------------------------------------------------
# Reference / test harness.
# ---------------------------------------------------------------------------

def init_params(key, hidden_size):
    """Deterministic synthetic init of MLP([2H, 4H, H, 1]) weights (bias=True)."""
    H = hidden_size
    dims = [2 * H, 4 * H, H, 1]
    keys = jax.random.split(key, 6)
    params = []
    for i in range(3):
        fan_in = dims[i]
        w = jax.random.normal(keys[2 * i], (dims[i], dims[i + 1]), jnp.float32)
        w = w * (1.0 / jnp.sqrt(jnp.float32(fan_in)))
        b = 0.01 * jax.random.normal(keys[2 * i + 1], (1, dims[i + 1]), jnp.float32)
        params += [w, b]
    return tuple(params)


def _reference_forward(emb, edge_index, batch, params, num_graphs):
    """Pure-JAX reference mirroring the kernel's precision choices (bf16 matmuls)."""
    w1, b1, w2, b2, w3, b3 = params
    col, row = edge_index[0], edge_index[1]
    eb = batch[col]
    counts = jnp.maximum(
        jnp.zeros((num_graphs,), jnp.float32).at[eb].add(1.0), 1.0)[:, None]

    def inorm(x):
        s = jnp.zeros((num_graphs, x.shape[1]), jnp.float32).at[eb].add(x)
        sq = jnp.zeros((num_graphs, x.shape[1]), jnp.float32).at[eb].add(x * x)
        mean = s / counts
        var = jnp.maximum(sq / counts - mean * mean, 0.0)
        return (x - mean[eb]) * jax.lax.rsqrt(var + _EPS)[eb]

    f12 = jnp.concatenate([emb[col], emb[row]], axis=-1).astype(jnp.bfloat16)
    h1p = jnp.dot(f12, w1.astype(jnp.bfloat16), preferred_element_type=jnp.float32) + b1
    h1 = jax.nn.relu(inorm(h1p))
    h2p = jnp.dot(h1.astype(jnp.bfloat16), w2.astype(jnp.bfloat16),
                  preferred_element_type=jnp.float32) + b2
    h2 = jax.nn.relu(inorm(h2p))
    return jnp.dot(h2, w3) + b3


if __name__ == "__main__":
    key = jax.random.PRNGKey(0)
    k_emb, k_edge, k_par = jax.random.split(key, 3)

    H = 32          # hidden_size
    N = 8           # nodes
    E = 16          # edges
    G = 2           # graphs in the batch

    emb = jax.random.normal(k_emb, (N, H), jnp.float32)
    edge_index = jax.random.randint(k_edge, (2, E), 0, N, dtype=jnp.int32)
    batch = jnp.array([0, 0, 0, 0, 1, 1, 1, 1], dtype=jnp.int32)    # graph id per node
    params = init_params(k_par, H)

    att_log_logits = extractor_mlp_forward(emb, edge_index, batch, params, num_graphs=G)
    jax.block_until_ready(att_log_logits)

    assert att_log_logits.shape == (E, 1)
    assert bool(jnp.all(jnp.isfinite(att_log_logits)))

    ref = _reference_forward(emb, edge_index, batch, params, G)
    max_err = float(jnp.max(jnp.abs(att_log_logits - ref)))
    assert bool(jnp.allclose(att_log_logits, ref, atol=5e-2, rtol=5e-2)), max_err

    print("KERNEL_OK")
</pallas_src>

<mosaic_0001>
module attributes {stable_mosaic.version = 11 : i64} {
  func.func @_stats1_kernel(%arg0: i32, %arg1: i32, %arg2: memref<128x64xbf16, #tpu.memory_space<vmem>>, %arg3: memref<1x1x128xi32, #tpu.memory_space<vmem>>, %arg4: memref<64x128xbf16, #tpu.memory_space<vmem>>, %arg5: memref<1x128xf32, #tpu.memory_space<vmem>>, %arg6: memref<1x8x256xf32, #tpu.memory_space<vmem>>) attributes {dimension_semantics = [#tpu.dimension_semantics<parallel>, #tpu.dimension_semantics<arbitrary>], iteration_bounds = array<i64: 1, 1>, scalar_prefetch = 0 : i64, scratch_operands = 0 : i64, tpu.core_type = #tpu.core_type<tc>, window_params = [{transform_indices = @transform_0, window_bounds = array<i64: 128, 64>}, {transform_indices = @transform_1, window_bounds = array<i64: 1, 1, 128>}, {pipeline_mode = #tpu.pipeline_mode<synchronous>, transform_indices = @transform_2, window_bounds = array<i64: 64, 128>}, {pipeline_mode = #tpu.pipeline_mode<synchronous>, transform_indices = @transform_3, window_bounds = array<i64: 1, 128>}, {transform_indices = @transform_4, window_bounds = array<i64: 1, 8, 256>}]} {
    %c0 = arith.constant 0 : index
    %c0_0 = arith.constant 0 : index
    %c0_1 = arith.constant 0 : index
    %0 = vector.load %arg3[%c0, %c0_0, %c0_1] : memref<1x1x128xi32, #tpu.memory_space<vmem>>, vector<1x1x128xi32>
    %1 = vector.shape_cast %0 : vector<1x1x128xi32> to vector<1x128xi32>
    %2 = tpu.iota {dimensions = array<i32: 0>} : vector<8x128xi32>
    %3 = vector.broadcast %1 : vector<1x128xi32> to vector<8x128xi32>
    %4 = arith.cmpi eq, %2, %3 : vector<8x128xi32>
    %5 = arith.extui %4 : vector<8x128xi1> to vector<8x128xi32>
    %6 = arith.sitofp %5 : vector<8x128xi32> to vector<8x128xf32>
    %c0_2 = arith.constant 0 : index
    %c0_3 = arith.constant 0 : index
    %7 = vector.load %arg2[%c0_2, %c0_3] : memref<128x64xbf16, #tpu.memory_space<vmem>>, vector<128x64xbf16>
    %c0_4 = arith.constant 0 : index
    %c0_5 = arith.constant 0 : index
    %8 = vector.load %arg4[%c0_4, %c0_5] : memref<64x128xbf16, #tpu.memory_space<vmem>>, vector<64x128xbf16>
    %cst = arith.constant dense<0.000000e+00> : vector<128x128xf32>
    %9 = tpu.matmul %7, %8, %cst {dimension_numbers = #tpu.dot_dimension_numbers<[1], [0], [0], [1], [0, 0, 1, 1], [], []>} : vector<128x64xbf16>, vector<64x128xbf16>, vector<128x128xf32> -> vector<128x128xf32>
    %c0_6 = arith.constant 0 : index
    %c0_7 = arith.constant 0 : index
    %10 = vector.load %arg5[%c0_6, %c0_7] : memref<1x128xf32, #tpu.memory_space<vmem>>, vector<1x128xf32>
    %11 = vector.broadcast %10 : vector<1x128xf32> to vector<128x128xf32>
    %12 = arith.addf %9, %11 : vector<128x128xf32>
    %c0_i32 = arith.constant 0 : i32
    %13 = arith.cmpi eq, %arg1, %c0_i32 : i32
    %14 = arith.extui %13 : i1 to i32
    %c0_i32_8 = arith.constant 0 : i32
    %15 = arith.cmpi ne, %14, %c0_i32_8 : i32
    scf.if %15 {
      %cst_22 = arith.constant 0.000000e+00 : f32
      %31 = vector.broadcast %cst_22 : f32 to vector<1x8x256xf32>
      %c0_23 = arith.constant 0 : index
      %c0_24 = arith.constant 0 : index
      %c0_25 = arith.constant 0 : index
      %32 = vector.load %arg6[%c0_23, %c0_24, %c0_25] : memref<1x8x256xf32, #tpu.memory_space<vmem>>, vector<1x8x256xf32>
      tpu.vector_store %arg6[%c0_23, %c0_24, %c0_25], %31 {strides = array<i32>} : memref<1x8x256xf32, #tpu.memory_space<vmem>>, vector<1x8x256xf32>,
    } else {
    }
    %c0_9 = arith.constant 0 : index
    %c0_10 = arith.constant 0 : index
    %c0_11 = arith.constant 0 : index
    %16 = vector.load %arg6[%c0_9, %c0_10, %c0_11] : memref<1x8x256xf32, #tpu.memory_space<vmem>>, vector<1x8x128xf32>
    %17 = vector.shape_cast %16 : vector<1x8x128xf32> to vector<8x128xf32>
    %cst_12 = arith.constant dense<0.000000e+00> : vector<8x128xf32>
    %18 = tpu.matmul %6, %12, %cst_12 {dimension_numbers = #tpu.dot_dimension_numbers<[1], [0], [0], [1], [0, 0, 1, 1], [], []>} : vector<8x128xf32>, vector<128x128xf32>, vector<8x128xf32> -> vector<8x128xf32>
    %19 = arith.addf %17, %18 : vector<8x128xf32>
    %c0_13 = arith.constant 0 : index
    %c0_14 = arith.constant 0 : index
    %c0_15 = arith.constant 0 : index
    %20 = vector.load %arg6[%c0_13, %c0_14, %c0_15] : memref<1x8x256xf32, #tpu.memory_space<vmem>>, vector<1x8x128xf32>
    %21 = vector.shape_cast %20 : vector<1x8x128xf32> to vector<8x128xf32>
    %22 = vector.shape_cast %19 : vector<8x128xf32> to vector<1x8x128xf32>
    tpu.vector_store %arg6[%c0_13, %c0_14, %c0_15], %22 {strides = array<i32>} : memref<1x8x256xf32, #tpu.memory_space<vmem>>, vector<1x8x128xf32>,
    %c0_16 = arith.constant 0 : index
    %c0_17 = arith.constant 0 : index
    %c128 = arith.constant 128 : index
    %23 = vector.load %arg6[%c0_16, %c0_17, %c128] : memref<1x8x256xf32, #tpu.memory_space<vmem>>, vector<1x8x128xf32>
    %24 = vector.shape_cast %23 : vector<1x8x128xf32> to vector<8x128xf32>
    %25 = arith.mulf %12, %12 : vector<128x128xf32>
    %cst_18 = arith.constant dense<0.000000e+00> : vector<8x128xf32>
    %26 = tpu.matmul %6, %25, %cst_18 {dimension_numbers = #tpu.dot_dimension_numbers<[1], [0], [0], [1], [0, 0, 1, 1], [], []>} : vector<8x128xf32>, vector<128x128xf32>, vector<8x128xf32> -> vector<8x128xf32>
    %27 = arith.addf %24, %26 : vector<8x128xf32>
    %c0_19 = arith.constant 0 : index
    %c0_20 = arith.constant 0 : index
    %c128_21 = arith.constant 128 : index
    %28 = vector.load %arg6[%c0_19, %c0_20, %c128_21] : memref<1x8x256xf32, #tpu.memory_space<vmem>>, vector<1x8x128xf32>
    %29 = vector.shape_cast %28 : vector<1x8x128xf32> to vector<8x128xf32>
    %30 = vector.shape_cast %27 : vector<8x128xf32> to vector<1x8x128xf32>
    tpu.vector_store %arg6[%c0_19, %c0_20, %c128_21], %30 {strides = array<i32>} : memref<1x8x256xf32, #tpu.memory_space<vmem>>, vector<1x8x128xf32>,
    return
  }
  func.func @transform_0(%arg0: i32, %arg1: i32) -> (i32, i32) {
    %c1_i32 = arith.constant 1 : i32
    %0 = arith.muli %arg0, %c1_i32 : i32
    %1 = arith.addi %0, %arg1 : i32
    %c0_i32 = arith.constant 0 : i32
    %c0_i32_0 = arith.constant 0 : i32
    return %1, %c0_i32 : i32, i32
  }
  func.func @transform_1(%arg0: i32, %arg1: i32) -> (i32, i32, i32) {
    %c1_i32 = arith.constant 1 : i32
    %0 = arith.muli %arg0, %c1_i32 : i32
    %1 = arith.addi %0, %arg1 : i32
    %c0_i32 = arith.constant 0 : i32
    %c0_i32_0 = arith.constant 0 : i32
    %c0_i32_1 = arith.constant 0 : i32
    return %1, %c0_i32, %c0_i32_0 : i32, i32, i32
  }
  func.func @transform_2(%arg0: i32, %arg1: i32) -> (i32, i32) {
    %c0_i32 = arith.constant 0 : i32
    %c0_i32_0 = arith.constant 0 : i32
    %c0_i32_1 = arith.constant 0 : i32
    return %c0_i32, %c0_i32_0 : i32, i32
  }
  func.func @transform_3(%arg0: i32, %arg1: i32) -> (i32, i32) {
    %c0_i32 = arith.constant 0 : i32
    %c0_i32_0 = arith.constant 0 : i32
    %c0_i32_1 = arith.constant 0 : i32
    return %c0_i32, %c0_i32_0 : i32, i32
  }
  func.func @transform_4(%arg0: i32, %arg1: i32) -> (i32, i32, i32) {
    %c0_i32 = arith.constant 0 : i32
    %c0_i32_0 = arith.constant 0 : i32
    %c0_i32_1 = arith.constant 0 : i32
    return %arg0, %c0_i32, %c0_i32_0 : i32, i32, i32
  }
}

module attributes {stable_mosaic.version = 11 : i64} {
  func.func @_stats2_kernel(%arg0: i32, %arg1: i32, %arg2: memref<128x64xbf16, #tpu.memory_space<vmem>>, %arg3: memref<1x1x128xi32, #tpu.memory_space<vmem>>, %arg4: memref<64x128xbf16, #tpu.memory_space<vmem>>, %arg5: memref<1x128xf32, #tpu.memory_space<vmem>>, %arg6: memref<8x256xf32, #tpu.memory_space<vmem>>, %arg7: memref<128x128xbf16, #tpu.memory_space<vmem>>, %arg8: memref<1x128xf32, #tpu.memory_space<vmem>>, %arg9: memref<1x8x256xf32, #tpu.memory_space<vmem>>) attributes {dimension_semantics = [#tpu.dimension_semantics<parallel>, #tpu.dimension_semantics<arbitrary>], iteration_bounds = array<i64: 1, 1>, scalar_prefetch = 0 : i64, scratch_operands = 0 : i64, tpu.core_type = #tpu.core_type<tc>, window_params = [{transform_indices = @transform_0, window_bounds = array<i64: 128, 64>}, {transform_indices = @transform_1, window_bounds = array<i64: 1, 1, 128>}, {pipeline_mode = #tpu.pipeline_mode<synchronous>, transform_indices = @transform_2, window_bounds = array<i64: 64, 128>}, {pipeline_mode = #tpu.pipeline_mode<synchronous>, transform_indices = @transform_3, window_bounds = array<i64: 1, 128>}, {pipeline_mode = #tpu.pipeline_mode<synchronous>, transform_indices = @transform_4, window_bounds = array<i64: 8, 256>}, {pipeline_mode = #tpu.pipeline_mode<synchronous>, transform_indices = @transform_5, window_bounds = array<i64: 128, 128>}, {pipeline_mode = #tpu.pipeline_mode<synchronous>, transform_indices = @transform_6, window_bounds = array<i64: 1, 128>}, {transform_indices = @transform_7, window_bounds = array<i64: 1, 8, 256>}]} {
    %c0 = arith.constant 0 : index
    %c0_0 = arith.constant 0 : index
    %c0_1 = arith.constant 0 : index
    %0 = vector.load %arg3[%c0, %c0_0, %c0_1] : memref<1x1x128xi32, #tpu.memory_space<vmem>>, vector<1x1x128xi32>
    %1 = vector.shape_cast %0 : vector<1x1x128xi32> to vector<1x128xi32>
    %2 = tpu.iota {dimensions = array<i32: 0>} : vector<8x128xi32>
    %3 = vector.broadcast %1 : vector<1x128xi32> to vector<8x128xi32>
    %4 = arith.cmpi eq, %2, %3 : vector<8x128xi32>
    %5 = arith.extui %4 : vector<8x128xi1> to vector<8x128xi32>
    %6 = arith.sitofp %5 : vector<8x128xi32> to vector<8x128xf32>
    %c0_2 = arith.constant 0 : index
    %c0_3 = arith.constant 0 : index
    %7 = vector.load %arg2[%c0_2, %c0_3] : memref<128x64xbf16, #tpu.memory_space<vmem>>, vector<128x64xbf16>
    %c0_4 = arith.constant 0 : index
    %c0_5 = arith.constant 0 : index
    %8 = vector.load %arg4[%c0_4, %c0_5] : memref<64x128xbf16, #tpu.memory_space<vmem>>, vector<64x128xbf16>
    %cst = arith.constant dense<0.000000e+00> : vector<128x128xf32>
    %9 = tpu.matmul %7, %8, %cst {dimension_numbers = #tpu.dot_dimension_numbers<[1], [0], [0], [1], [0, 0, 1, 1], [], []>} : vector<128x64xbf16>, vector<64x128xbf16>, vector<128x128xf32> -> vector<128x128xf32>
    %c0_6 = arith.constant 0 : index
    %c0_7 = arith.constant 0 : index
    %10 = vector.load %arg5[%c0_6, %c0_7] : memref<1x128xf32, #tpu.memory_space<vmem>>, vector<1x128xf32>
    %11 = vector.broadcast %10 : vector<1x128xf32> to vector<128x128xf32>
    %12 = arith.addf %9, %11 : vector<128x128xf32>
    %c0_8 = arith.constant 0 : index
    %c0_9 = arith.constant 0 : index
    %13 = vector.load %arg6[%c0_8, %c0_9] : memref<8x256xf32, #tpu.memory_space<vmem>>, vector<8x256xf32>
    %cst_10 = arith.constant dense<0.000000e+00> : vector<128x256xf32>
    %14 = tpu.matmul %6, %13, %cst_10 {dimension_numbers = #tpu.dot_dimension_numbers<[0], [0], [1], [1], [0, 1, 1, 1], [], []>} : vector<8x128xf32>, vector<8x256xf32>, vector<128x256xf32> -> vector<128x256xf32>
    %15 = vector.extract_strided_slice %14 {offsets = [0, 0], sizes = [128, 128], strides = [1, 1]} : vector<128x256xf32> to vector<128x128xf32>
    %16 = arith.subf %12, %15 : vector<128x128xf32>
    %17 = vector.extract_strided_slice %14 {offsets = [0, 128], sizes = [128, 128], strides = [1, 1]} : vector<128x256xf32> to vector<128x128xf32>
    %18 = arith.mulf %16, %17 : vector<128x128xf32>
    %cst_11 = arith.constant 0.000000e+00 : f32
    %19 = vector.broadcast %cst_11 : f32 to vector<128x128xf32>
    %20 = arith.maximumf %18, %19 : vector<128x128xf32>
    %21 = arith.truncf %20 : vector<128x128xf32> to vector<128x128xbf16>
    %c0_12 = arith.constant 0 : index
    %c0_13 = arith.constant 0 : index
    %22 = vector.load %arg7[%c0_12, %c0_13] : memref<128x128xbf16, #tpu.memory_space<vmem>>, vector<128x128xbf16>
    %cst_14 = arith.constant dense<0.000000e+00> : vector<128x128xf32>
    %23 = tpu.matmul %21, %22, %cst_14 {dimension_numbers = #tpu.dot_dimension_numbers<[1], [0], [0], [1], [0, 0, 1, 1], [], []>} : vector<128x128xbf16>, vector<128x128xbf16>, vector<128x128xf32> -> vector<128x128xf32>
    %c0_15 = arith.constant 0 : index
    %c0_16 = arith.constant 0 : index
    %24 = vector.load %arg8[%c0_15, %c0_16] : memref<1x128xf32, #tpu.memory_space<vmem>>, vector<1x128xf32>
    %25 = vector.broadcast %24 : vector<1x128xf32> to vector<128x128xf32>
    %26 = arith.addf %23, %25 : vector<128x128xf32>
    %c0_i32 = arith.constant 0 : i32
    %27 = arith.cmpi eq, %arg1, %c0_i32 : i32
    %28 = arith.extui %27 : i1 to i32
    %c0_i32_17 = arith.constant 0 : i32
    %29 = arith.cmpi ne, %28, %c0_i32_17 : i32
    scf.if %29 {
      %cst_31 = arith.constant 0.000000e+00 : f32
      %45 = vector.broadcast %cst_31 : f32 to vector<1x8x256xf32>
      %c0_32 = arith.constant 0 : index
      %c0_33 = arith.constant 0 : index
      %c0_34 = arith.constant 0 : index
      %46 = vector.load %arg9[%c0_32, %c0_33, %c0_34] : memref<1x8x256xf32, #tpu.memory_space<vmem>>, vector<1x8x256xf32>
      tpu.vector_store %arg9[%c0_32, %c0_33, %c0_34], %45 {strides = array<i32>} : memref<1x8x256xf32, #tpu.memory_space<vmem>>, vector<1x8x256xf32>,
    } else {
    }
    %c0_18 = arith.constant 0 : index
    %c0_19 = arith.constant 0 : index
    %c0_20 = arith.constant 0 : index
    %30 = vector.load %arg9[%c0_18, %c0_19, %c0_20] : memref<1x8x256xf32, #tpu.memory_space<vmem>>, vector<1x8x128xf32>
    %31 = vector.shape_cast %30 : vector<1x8x128xf32> to vector<8x128xf32>
    %cst_21 = arith.constant dense<0.000000e+00> : vector<8x128xf32>
    %32 = tpu.matmul %6, %26, %cst_21 {dimension_numbers = #tpu.dot_dimension_numbers<[1], [0], [0], [1], [0, 0, 1, 1], [], []>} : vector<8x128xf32>, vector<128x128xf32>, vector<8x128xf32> -> vector<8x128xf32>
    %33 = arith.addf %31, %32 : vector<8x128xf32>
    %c0_22 = arith.constant 0 : index
    %c0_23 = arith.constant 0 : index
    %c0_24 = arith.constant 0 : index
    %34 = vector.load %arg9[%c0_22, %c0_23, %c0_24] : memref<1x8x256xf32, #tpu.memory_space<vmem>>, vector<1x8x128xf32>
    %35 = vector.shape_cast %34 : vector<1x8x128xf32> to vector<8x128xf32>
    %36 = vector.shape_cast %33 : vector<8x128xf32> to vector<1x8x128xf32>
    tpu.vector_store %arg9[%c0_22, %c0_23, %c0_24], %36 {strides = array<i32>} : memref<1x8x256xf32, #tpu.memory_space<vmem>>, vector<1x8x128xf32>,
    %c0_25 = arith.constant 0 : index
    %c0_26 = arith.constant 0 : index
    %c128 = arith.constant 128 : index
    %37 = vector.load %arg9[%c0_25, %c0_26, %c128] : memref<1x8x256xf32, #tpu.memory_space<vmem>>, vector<1x8x128xf32>
    %38 = vector.shape_cast %37 : vector<1x8x128xf32> to vector<8x128xf32>
    %39 = arith.mulf %26, %26 : vector<128x128xf32>
    %cst_27 = arith.constant dense<0.000000e+00> : vector<8x128xf32>
    %40 = tpu.matmul %6, %39, %cst_27 {dimension_numbers = #tpu.dot_dimension_numbers<[1], [0], [0], [1], [0, 0, 1, 1], [], []>} : vector<8x128xf32>, vector<128x128xf32>, vector<8x128xf32> -> vector<8x128xf32>
    %41 = arith.addf %38, %40 : vector<8x128xf32>
    %c0_28 = arith.constant 0 : index
    %c0_29 = arith.constant 0 : index
    %c128_30 = arith.constant 128 : index
    %42 = vector.load %arg9[%c0_28, %c0_29, %c128_30] : memref<1x8x256xf32, #tpu.memory_space<vmem>>, vector<1x8x128xf32>
    %43 = vector.shape_cast %42 : vector<1x8x128xf32> to vector<8x128xf32>
    %44 = vector.shape_cast %41 : vector<8x128xf32> to vector<1x8x128xf32>
    tpu.vector_store %arg9[%c0_28, %c0_29, %c128_30], %44 {strides = array<i32>} : memref<1x8x256xf32, #tpu.memory_space<vmem>>, vector<1x8x128xf32>,
    return
  }
  func.func @transform_0(%arg0: i32, %arg1: i32) -> (i32, i32) {
    %c1_i32 = arith.constant 1 : i32
    %0 = arith.muli %arg0, %c1_i32 : i32
    %1 = arith.addi %0, %arg1 : i32
    %c0_i32 = arith.constant 0 : i32
    %c0_i32_0 = arith.constant 0 : i32
    return %1, %c0_i32 : i32, i32
  }
  func.func @transform_1(%arg0: i32, %arg1: i32) -> (i32, i32, i32) {
    %c1_i32 = arith.constant 1 : i32
    %0 = arith.muli %arg0, %c1_i32 : i32
    %1 = arith.addi %0, %arg1 : i32
    %c0_i32 = arith.constant 0 : i32
    %c0_i32_0 = arith.constant 0 : i32
    %c0_i32_1 = arith.constant 0 : i32
    return %1, %c0_i32, %c0_i32_0 : i32, i32, i32
  }
  func.func @transform_2(%arg0: i32, %arg1: i32) -> (i32, i32) {
    %c0_i32 = arith.constant 0 : i32
    %c0_i32_0 = arith.constant 0 : i32
    %c0_i32_1 = arith.constant 0 : i32
    return %c0_i32, %c0_i32_0 : i32, i32
  }
  func.func @transform_3(%arg0: i32, %arg1: i32) -> (i32, i32) {
    %c0_i32 = arith.constant 0 : i32
    %c0_i32_0 = arith.constant 0 : i32
    %c0_i32_1 = arith.constant 0 : i32
    return %c0_i32, %c0_i32_0 : i32, i32
  }
  func.func @transform_4(%arg0: i32, %arg1: i32) -> (i32, i32) {
    %c0_i32 = arith.constant 0 : i32
    %c0_i32_0 = arith.constant 0 : i32
    %c0_i32_1 = arith.constant 0 : i32
    return %c0_i32, %c0_i32_0 : i32, i32
  }
  func.func @transform_5(%arg0: i32, %arg1: i32) -> (i32, i32) {
    %c0_i32 = arith.constant 0 : i32
    %c0_i32_0 = arith.constant 0 : i32
    %c0_i32_1 = arith.constant 0 : i32
    return %c0_i32, %c0_i32_0 : i32, i32
  }
  func.func @transform_6(%arg0: i32, %arg1: i32) -> (i32, i32) {
    %c0_i32 = arith.constant 0 : i32
    %c0_i32_0 = arith.constant 0 : i32
    %c0_i32_1 = arith.constant 0 : i32
    return %c0_i32, %c0_i32_0 : i32, i32
  }
  func.func @transform_7(%arg0: i32, %arg1: i32) -> (i32, i32, i32) {
    %c0_i32 = arith.constant 0 : i32
    %c0_i32_0 = arith.constant 0 : i32
    %c0_i32_1 = arith.constant 0 : i32
    return %arg0, %c0_i32, %c0_i32_0 : i32, i32, i32
  }
}

module attributes {stable_mosaic.version = 11 : i64} {
  func.func @_apply_kernel(%arg0: i32, %arg1: memref<128x64xbf16, #tpu.memory_space<vmem>>, %arg2: memref<1x1x128xi32, #tpu.memory_space<vmem>>, %arg3: memref<64x128xbf16, #tpu.memory_space<vmem>>, %arg4: memref<1x128xf32, #tpu.memory_space<vmem>>, %arg5: memref<8x256xf32, #tpu.memory_space<vmem>>, %arg6: memref<128x128xbf16, #tpu.memory_space<vmem>>, %arg7: memref<1x128xf32, #tpu.memory_space<vmem>>, %arg8: memref<8x256xf32, #tpu.memory_space<vmem>>, %arg9: memref<1x128xf32, #tpu.memory_space<vmem>>, %arg10: memref<1x1xf32, #tpu.memory_space<smem>>, %arg11: memref<1x1x128xf32, #tpu.memory_space<vmem>>) attributes {dimension_semantics = [#tpu.dimension_semantics<parallel>], iteration_bounds = array<i64: 1>, scalar_prefetch = 0 : i64, scratch_operands = 0 : i64, tpu.core_type = #tpu.core_type<tc>, window_params = [{transform_indices = @transform_0, window_bounds = array<i64: 128, 64>}, {transform_indices = @transform_1, window_bounds = array<i64: 1, 1, 128>}, {pipeline_mode = #tpu.pipeline_mode<synchronous>, transform_indices = @transform_2, window_bounds = array<i64: 64, 128>}, {pipeline_mode = #tpu.pipeline_mode<synchronous>, transform_indices = @transform_3, window_bounds = array<i64: 1, 128>}, {pipeline_mode = #tpu.pipeline_mode<synchronous>, transform_indices = @transform_4, window_bounds = array<i64: 8, 256>}, {pipeline_mode = #tpu.pipeline_mode<synchronous>, transform_indices = @transform_5, window_bounds = array<i64: 128, 128>}, {pipeline_mode = #tpu.pipeline_mode<synchronous>, transform_indices = @transform_6, window_bounds = array<i64: 1, 128>}, {pipeline_mode = #tpu.pipeline_mode<synchronous>, transform_indices = @transform_7, window_bounds = array<i64: 8, 256>}, {pipeline_mode = #tpu.pipeline_mode<synchronous>, transform_indices = @transform_8, window_bounds = array<i64: 1, 128>}, {transform_indices = @transform_9, window_bounds = array<i64: 1, 1>}, {transform_indices = @transform_10, window_bounds = array<i64: 1, 1, 128>}]} {
    %c0 = arith.constant 0 : index
    %c0_0 = arith.constant 0 : index
    %c0_1 = arith.constant 0 : index
    %0 = vector.load %arg2[%c0, %c0_0, %c0_1] : memref<1x1x128xi32, #tpu.memory_space<vmem>>, vector<1x1x128xi32>
    %1 = vector.shape_cast %0 : vector<1x1x128xi32> to vector<1x128xi32>
    %2 = tpu.iota {dimensions = array<i32: 0>} : vector<8x128xi32>
    %3 = vector.broadcast %1 : vector<1x128xi32> to vector<8x128xi32>
    %4 = arith.cmpi eq, %2, %3 : vector<8x128xi32>
    %5 = arith.extui %4 : vector<8x128xi1> to vector<8x128xi32>
    %6 = arith.sitofp %5 : vector<8x128xi32> to vector<8x128xf32>
    %c0_2 = arith.constant 0 : index
    %c0_3 = arith.constant 0 : index
    %7 = vector.load %arg1[%c0_2, %c0_3] : memref<128x64xbf16, #tpu.memory_space<vmem>>, vector<128x64xbf16>
    %c0_4 = arith.constant 0 : index
    %c0_5 = arith.constant 0 : index
    %8 = vector.load %arg3[%c0_4, %c0_5] : memref<64x128xbf16, #tpu.memory_space<vmem>>, vector<64x128xbf16>
    %cst = arith.constant dense<0.000000e+00> : vector<128x128xf32>
    %9 = tpu.matmul %7, %8, %cst {dimension_numbers = #tpu.dot_dimension_numbers<[1], [0], [0], [1], [0, 0, 1, 1], [], []>} : vector<128x64xbf16>, vector<64x128xbf16>, vector<128x128xf32> -> vector<128x128xf32>
    %c0_6 = arith.constant 0 : index
    %c0_7 = arith.constant 0 : index
    %10 = vector.load %arg4[%c0_6, %c0_7] : memref<1x128xf32, #tpu.memory_space<vmem>>, vector<1x128xf32>
    %11 = vector.broadcast %10 : vector<1x128xf32> to vector<128x128xf32>
    %12 = arith.addf %9, %11 : vector<128x128xf32>
    %c0_8 = arith.constant 0 : index
    %c0_9 = arith.constant 0 : index
    %13 = vector.load %arg5[%c0_8, %c0_9] : memref<8x256xf32, #tpu.memory_space<vmem>>, vector<8x256xf32>
    %cst_10 = arith.constant dense<0.000000e+00> : vector<128x256xf32>
    %14 = tpu.matmul %6, %13, %cst_10 {dimension_numbers = #tpu.dot_dimension_numbers<[0], [0], [1], [1], [0, 1, 1, 1], [], []>} : vector<8x128xf32>, vector<8x256xf32>, vector<128x256xf32> -> vector<128x256xf32>
    %15 = vector.extract_strided_slice %14 {offsets = [0, 0], sizes = [128, 128], strides = [1, 1]} : vector<128x256xf32> to vector<128x128xf32>
    %16 = arith.subf %12, %15 : vector<128x128xf32>
    %17 = vector.extract_strided_slice %14 {offsets = [0, 128], sizes = [128, 128], strides = [1, 1]} : vector<128x256xf32> to vector<128x128xf32>
    %18 = arith.mulf %16, %17 : vector<128x128xf32>
    %cst_11 = arith.constant 0.000000e+00 : f32
    %19 = vector.broadcast %cst_11 : f32 to vector<128x128xf32>
    %20 = arith.maximumf %18, %19 : vector<128x128xf32>
    %21 = arith.truncf %20 : vector<128x128xf32> to vector<128x128xbf16>
    %c0_12 = arith.constant 0 : index
    %c0_13 = arith.constant 0 : index
    %22 = vector.load %arg6[%c0_12, %c0_13] : memref<128x128xbf16, #tpu.memory_space<vmem>>, vector<128x128xbf16>
    %cst_14 = arith.constant dense<0.000000e+00> : vector<128x128xf32>
    %23 = tpu.matmul %21, %22, %cst_14 {dimension_numbers = #tpu.dot_dimension_numbers<[1], [0], [0], [1], [0, 0, 1, 1], [], []>} : vector<128x128xbf16>, vector<128x128xbf16>, vector<128x128xf32> -> vector<128x128xf32>
    %c0_15 = arith.constant 0 : index
    %c0_16 = arith.constant 0 : index
    %24 = vector.load %arg7[%c0_15, %c0_16] : memref<1x128xf32, #tpu.memory_space<vmem>>, vector<1x128xf32>
    %25 = vector.broadcast %24 : vector<1x128xf32> to vector<128x128xf32>
    %26 = arith.addf %23, %25 : vector<128x128xf32>
    %c0_17 = arith.constant 0 : index
    %c0_18 = arith.constant 0 : index
    %27 = vector.load %arg8[%c0_17, %c0_18] : memref<8x256xf32, #tpu.memory_space<vmem>>, vector<8x256xf32>
    %cst_19 = arith.constant dense<0.000000e+00> : vector<128x256xf32>
    %28 = tpu.matmul %6, %27, %cst_19 {dimension_numbers = #tpu.dot_dimension_numbers<[0], [0], [1], [1], [0, 1, 1, 1], [], []>} : vector<8x128xf32>, vector<8x256xf32>, vector<128x256xf32> -> vector<128x256xf32>
    %29 = vector.extract_strided_slice %28 {offsets = [0, 0], sizes = [128, 128], strides = [1, 1]} : vector<128x256xf32> to vector<128x128xf32>
    %30 = arith.subf %26, %29 : vector<128x128xf32>
    %31 = vector.extract_strided_slice %28 {offsets = [0, 128], sizes = [128, 128], strides = [1, 1]} : vector<128x256xf32> to vector<128x128xf32>
    %32 = arith.mulf %30, %31 : vector<128x128xf32>
    %cst_20 = arith.constant 0.000000e+00 : f32
    %33 = vector.broadcast %cst_20 : f32 to vector<128x128xf32>
    %34 = arith.maximumf %32, %33 : vector<128x128xf32>
    %c0_21 = arith.constant 0 : index
    %c0_22 = arith.constant 0 : index
    %35 = vector.load %arg9[%c0_21, %c0_22] : memref<1x128xf32, #tpu.memory_space<vmem>>, vector<1x128xf32>
    %cst_23 = arith.constant dense<0.000000e+00> : vector<1x128xf32>
    %36 = tpu.matmul %35, %34, %cst_23 {dimension_numbers = #tpu.dot_dimension_numbers<[1], [1], [0], [0], [0, 0, 1, 0], [], []>} : vector<1x128xf32>, vector<128x128xf32>, vector<1x128xf32> -> vector<1x128xf32>
    %c0_24 = arith.constant 0 : index
    %c0_25 = arith.constant 0 : index
    %37 = memref.load %arg10[%c0_24, %c0_25] : memref<1x1xf32, #tpu.memory_space<smem>>
    %38 = vector.broadcast %37 : f32 to vector<1x128xf32>
    %39 = arith.addf %36, %38 : vector<1x128xf32>
    %c0_26 = arith.constant 0 : index
    %c0_27 = arith.constant 0 : index
    %c0_28 = arith.constant 0 : index
    %40 = vector.load %arg11[%c0_26, %c0_27, %c0_28] : memref<1x1x128xf32, #tpu.memory_space<vmem>>, vector<1x1x128xf32>
    %41 = vector.shape_cast %40 : vector<1x1x128xf32> to vector<1x128xf32>
    %42 = vector.shape_cast %39 : vector<1x128xf32> to vector<1x1x128xf32>
    tpu.vector_store %arg11[%c0_26, %c0_27, %c0_28], %42 {strides = array<i32>} : memref<1x1x128xf32, #tpu.memory_space<vmem>>, vector<1x1x128xf32>,
    return
  }
  func.func @transform_0(%arg0: i32) -> (i32, i32) {
    %c0_i32 = arith.constant 0 : i32
    %c0_i32_0 = arith.constant 0 : i32
    return %arg0, %c0_i32 : i32, i32
  }
  func.func @transform_1(%arg0: i32) -> (i32, i32, i32) {
    %c0_i32 = arith.constant 0 : i32
    %c0_i32_0 = arith.constant 0 : i32
    %c0_i32_1 = arith.constant 0 : i32
    return %arg0, %c0_i32, %c0_i32_0 : i32, i32, i32
  }
  func.func @transform_2(%arg0: i32) -> (i32, i32) {
    %c0_i32 = arith.constant 0 : i32
    %c0_i32_0 = arith.constant 0 : i32
    %c0_i32_1 = arith.constant 0 : i32
    return %c0_i32, %c0_i32_0 : i32, i32
  }
  func.func @transform_3(%arg0: i32) -> (i32, i32) {
    %c0_i32 = arith.constant 0 : i32
    %c0_i32_0 = arith.constant 0 : i32
    %c0_i32_1 = arith.constant 0 : i32
    return %c0_i32, %c0_i32_0 : i32, i32
  }
  func.func @transform_4(%arg0: i32) -> (i32, i32) {
    %c0_i32 = arith.constant 0 : i32
    %c0_i32_0 = arith.constant 0 : i32
    %c0_i32_1 = arith.constant 0 : i32
    return %c0_i32, %c0_i32_0 : i32, i32
  }
  func.func @transform_5(%arg0: i32) -> (i32, i32) {
    %c0_i32 = arith.constant 0 : i32
    %c0_i32_0 = arith.constant 0 : i32
    %c0_i32_1 = arith.constant 0 : i32
    return %c0_i32, %c0_i32_0 : i32, i32
  }
  func.func @transform_6(%arg0: i32) -> (i32, i32) {
    %c0_i32 = arith.constant 0 : i32
    %c0_i32_0 = arith.constant 0 : i32
    %c0_i32_1 = arith.constant 0 : i32
    return %c0_i32, %c0_i32_0 : i32, i32
  }
  func.func @transform_7(%arg0: i32) -> (i32, i32) {
    %c0_i32 = arith.constant 0 : i32
    %c0_i32_0 = arith.constant 0 : i32
    %c0_i32_1 = arith.constant 0 : i32
    return %c0_i32, %c0_i32_0 : i32, i32
  }
  func.func @transform_8(%arg0: i32) -> (i32, i32) {
    %c0_i32 = arith.constant 0 : i32
    %c0_i32_0 = arith.constant 0 : i32
    %c0_i32_1 = arith.constant 0 : i32
    return %c0_i32, %c0_i32_0 : i32, i32
  }
  func.func @transform_9(%arg0: i32) -> (i32, i32) {
    %c0_i32 = arith.constant 0 : i32
    %c0_i32_0 = arith.constant 0 : i32
    %c0_i32_1 = arith.constant 0 : i32
    return %c0_i32, %c0_i32_0 : i32, i32
  }
  func.func @transform_10(%arg0: i32) -> (i32, i32, i32) {
    %c0_i32 = arith.constant 0 : i32
    %c0_i32_0 = arith.constant 0 : i32
    %c0_i32_1 = arith.constant 0 : i32
    return %arg0, %c0_i32, %c0_i32_0 : i32, i32, i32
  }
}

</mosaic_0001>

<llo_original>
// kernel: _forward_impl.3
$region0: #{_forward_impl.3}
  #allocation0 [shape = 'u32[]', space=smem, size = 0x4, offset = 0x4, fixed_abs, tag = 'smem constant byte address 0x4 - core index']
  #allocation1 [shape = 'u32[72,128]{1,0:T(1,128)}', space=vmem, size = 0x9000, scoped, tag = 'internal scratch']
  %s0 = inlined_call_operand.vmem [shape: bf16[128,64], index: 0, kind: input, shape index: {}]
  %s1 = inlined_call_operand.vmem [shape: s32[1,1,128], index: 1, kind: input, shape index: {}]
  %s2 = inlined_call_operand.vmem [shape: bf16[64,128], index: 2, kind: input, shape index: {}]
  %s3 = inlined_call_operand.vmem [shape: f32[1,128], index: 3, kind: input, shape index: {}]
  %s4 = inlined_call_operand.vmem [shape: f32[1,8,256], index: 4, kind: output, shape index: {}]
  %s5 = sld [smem:[#allocation0]]
  $region30: #{_forward_impl.3} parent=0
    _
  %s7 = ssub.s32 1, %s5
  %s8 = scalar_select 0, %s7, %s5
  // Predicated region
  $region2: #{_forward_impl.3} parent=0 // pred_check
    _
  $region3: #{_forward_impl.3} parent=0 // pred_check_branch
    %10 = sbr.rel (0) target = $region5
  $region4: #{_forward_impl.3} parent=0 // pred_region
    %s11 = sadd.s32 0, 0
    %s12 = smul.u32 16, %s11
    %p13 = scmp.lt.s32.totalorder %s12, 15
    %s14 = scalar_select %p13, %s12, 15
    %s15 = smul.addr %s14, 4
    %s16 = scalar_lea.vmem %s0, %s15
    %s17 = sadd.s32 0, 0
    %s18 = smul.u32 16, %s17
  $region5: #{_forward_impl.3} parent=0 // pred_fallthru
    _
  // Predicated region
  $region6: #{_forward_impl.3} parent=0 // pred_check
    _
  $region7: #{_forward_impl.3} parent=0 // pred_check_branch
    %20 = sbr.rel (0) target = $region9
  $region8: #{_forward_impl.3} parent=0 // pred_region
    %s21 = sadd.s32 0, 0
    %p22 = scmp.lt.s32.totalorder %s21, 0
    %s23 = scalar_select %p22, %s21, 0
    %s24 = scalar_lea.vmem %s1, %s23
    %s25 = sadd.s32 0, 0
  $region9: #{_forward_impl.3} parent=0 // pred_fallthru
    _
  // Predicated region
  $region10: #{_forward_impl.3} parent=0 // pred_check
    _
  $region11: #{_forward_impl.3} parent=0 // pred_check_branch
    %27 = sbr.rel (0) target = $region13
  $region12: #{_forward_impl.3} parent=0 // pred_region
    _
  $region13: #{_forward_impl.3} parent=0 // pred_fallthru
    _
  // Predicated region
  $region14: #{_forward_impl.3} parent=0 // pred_check
    _
  $region15: #{_forward_impl.3} parent=0 // pred_check_branch
    %29 = sbr.rel (0) target = $region17
  $region16: #{_forward_impl.3} parent=0 // pred_region
    _
  $region17: #{_forward_impl.3} parent=0 // pred_fallthru
    _
  %s30 = sadd.s32 0, 0
  %s31 = smul.u32 16, %s30
  %p32 = scmp.lt.s32.totalorder %s31, 15
  %s33 = scalar_select %p32, %s31, 15
  %s34 = smul.addr %s33, 4
  %s35 = scalar_lea.vmem %s0, %s34
  %s36 = sadd.s32 0, 0
  %p37 = scmp.lt.s32.totalorder %s36, 0
  %s38 = scalar_select %p37, %s36, 0
  %s39 = scalar_lea.vmem %s1, %s38
  %s40 = sadd.s32 0, 0
  %s41 = smul.u32 16, %s40
  %p42 = scmp.lt.s32.totalorder %s41, 15
  %s43 = scalar_select %p42, %s41, 15
  %s44 = smul.addr %s43, 4
  %s45 = scalar_lea.vmem %s0, %s44
  %s46 = sadd.s32 0, 0
  %s47 = smul.u32 16, %s46
  %s48 = sadd.s32 0, 0
  %p49 = scmp.lt.s32.totalorder %s48, 0
  %s50 = scalar_select %p49, %s48, 0
  %s51 = scalar_lea.vmem %s1, %s50
  %s52 = sadd.s32 0, 0
  %v54 = vld [vmem:[%s51] sm:$0x1]
  %v55 = vlaneseq
  %v56 = vshrl.u32 %v55, 7
  %v57 = vperm.slane %v54, 0
  %vm58 = vcmp.eq.s32.totalorder %v56, %v57
  %v59 = vsel %vm58, 1, 0
  %v60 = vcvt.s32.f32 %v59
  %v61 = vld [vmem:[%s45] sm:$0xf]
  %v62 = vld [vmem:[%s45 + $0x4] sm:$0xf]
  %v63 = vld [vmem:[%s45 + $0x8] sm:$0xf]
  %v64 = vld [vmem:[%s45 + $0xc] sm:$0xf]
  %v65 = vld [vmem:[%s45 + $0x10] sm:$0xf]
  %v66 = vld [vmem:[%s45 + $0x14] sm:$0xf]
  %v67 = vld [vmem:[%s45 + $0x18] sm:$0xf]
  %v68 = vld [vmem:[%s45 + $0x1c] sm:$0xf]
  %v69 = vld [vmem:[%s45 + $0x20] sm:$0xf]
  %v70 = vld [vmem:[%s45 + $0x24] sm:$0xf]
  %v71 = vld [vmem:[%s45 + $0x28] sm:$0xf]
  %v72 = vld [vmem:[%s45 + $0x2c] sm:$0xf]
  %v73 = vld [vmem:[%s45 + $0x30] sm:$0xf]
  %v74 = vld [vmem:[%s45 + $0x34] sm:$0xf]
  %v75 = vld [vmem:[%s45 + $0x38] sm:$0xf]
  %v76 = vld [vmem:[%s45 + $0x3c] sm:$0xf]
  %v77 = vld [vmem:[%s2] sm:$0xf]
  %v78 = vld [vmem:[%s2 + $0x4] sm:$0xf]
  %v79 = vld [vmem:[%s2 + $0x8] sm:$0xf]
  %v80 = vld [vmem:[%s2 + $0xc] sm:$0xf]
  %v81 = vld [vmem:[%s2 + $0x10] sm:$0xf]
  %v82 = vld [vmem:[%s2 + $0x14] sm:$0xf]
  %v83 = vld [vmem:[%s2 + $0x18] sm:$0xf]
  %v84 = vld [vmem:[%s2 + $0x1c] sm:$0xf]
  %v85 = vld [vmem:[%s3] sm:$0x1]
  %v87 = vperm.slane %v85, 0
  %v105 = vunpack.c.l.b16 %v61
  %v106 = vunpack.c.l.b16 %v62
  %v107 = vunpack.c.l.b16 %v63
  %v108 = vunpack.c.l.b16 %v64
  %v109 = vunpack.c.l.b16 %v65
  %v110 = vunpack.c.l.b16 %v66
  %v111 = vunpack.c.l.b16 %v67
  %v112 = vunpack.c.l.b16 %v68
  %v113 = vunpack.c.l.b16 %v69
  %v114 = vunpack.c.l.b16 %v70
  %v115 = vunpack.c.l.b16 %v71
  %v116 = vunpack.c.l.b16 %v72
  %v117 = vunpack.c.l.b16 %v73
  %v118 = vunpack.c.l.b16 %v74
  %v119 = vunpack.c.l.b16 %v75
  %v120 = vunpack.c.l.b16 %v76
  %v121 = vpack.c.b16 %v106, %v105
  %v122 = vpack.c.b16 %v108, %v107
  %v123 = vpack.c.b16 %v110, %v109
  %v124 = vpack.c.b16 %v112, %v111
  %v125 = vpack.c.b16 %v114, %v113
  %v126 = vpack.c.b16 %v116, %v115
  %v127 = vpack.c.b16 %v118, %v117
  %v128 = vpack.c.b16 %v120, %v119
  %v137 = vunpack.c.l.b16 %v77
  %v138 = vunpack.c.l.b16 %v78
  %v139 = vunpack.c.l.b16 %v79
  %v140 = vunpack.c.l.b16 %v80
  %v141 = vunpack.c.l.b16 %v81
  %v142 = vunpack.c.l.b16 %v82
  %v143 = vunpack.c.l.b16 %v83
  %v144 = vunpack.c.l.b16 %v84
  %v145 = vpack.c.b16 %v138, %v137
  %v146 = vpack.c.b16 %v140, %v139
  %v147 = vpack.c.b16 %v142, %v141
  %v148 = vpack.c.b16 %v144, %v143
  %vm153 = vcmask 523264
  %v155 = vsel %vm153, %v121, 0
  %v158 = vsel %vm153, %v122, 0
  %v161 = vsel %vm153, %v123, 0
  %v164 = vsel %vm153, %v124, 0
  %v167 = vsel %vm153, %v125, 0
  %v170 = vsel %vm153, %v126, 0
  %v173 = vsel %vm153, %v127, 0
  %v176 = vsel %vm153, %v128, 0
  %178 = vmatpush.bf16.msra.mxu0 0
  %179 = vmatpush.bf16.msra.mxu0 0
  %180 = vmatpush.bf16.msra.mxu0 0
  %181 = vmatpush.bf16.msra.mxu0 0
  %182 = vmatpush.bf16.msra.mxu0 %v148
  %183 = vmatpush.bf16.msra.mxu0 %v147
  %184 = vmatpush.bf16.msra.mxu0 %v146
  %185 = vmatpush.bf16.msra.mxu0 %v145
  %186 = vmatmul.bf16.gmra.mxu0 %v155
  %v187 = vpop.f32.mrf.mxu0
  %v188 = vadd.f32 %v87, %v187
  %v189 = vpop.f32.mrf.mxu0
  %v190 = vadd.f32 %v87, %v189
  %191 = vmatmul.bf16.gmra.mxu0 %v158
  %v192 = vpop.f32.mrf.mxu0
  %v193 = vadd.f32 %v87, %v192
  %v194 = vpop.f32.mrf.mxu0
  %v195 = vadd.f32 %v87, %v194
  %196 = vmatmul.bf16.gmra.mxu0 %v161
  %v197 = vpop.f32.mrf.mxu0
  %v198 = vadd.f32 %v87, %v197
  %v199 = vpop.f32.mrf.mxu0
  %v200 = vadd.f32 %v87, %v199
  %201 = vmatmul.bf16.gmra.mxu0 %v164
  %v202 = vpop.f32.mrf.mxu0
  %v203 = vadd.f32 %v87, %v202
  %v204 = vpop.f32.mrf.mxu0
  %v205 = vadd.f32 %v87, %v204
  %206 = vmatmul.bf16.gmra.mxu0 %v167
  %v207 = vpop.f32.mrf.mxu0
  %v208 = vadd.f32 %v87, %v207
  %v209 = vpop.f32.mrf.mxu0
  %v210 = vadd.f32 %v87, %v209
  %211 = vmatmul.bf16.gmra.mxu0 %v170
  %v212 = vpop.f32.mrf.mxu0
  %v213 = vadd.f32 %v87, %v212
  %v214 = vpop.f32.mrf.mxu0
  %v215 = vadd.f32 %v87, %v214
  %216 = vmatmul.bf16.gmra.mxu0 %v173
  %v217 = vpop.f32.mrf.mxu0
  %v218 = vadd.f32 %v87, %v217
  %v219 = vpop.f32.mrf.mxu0
  %v220 = vadd.f32 %v87, %v219
  %221 = vmatmul.bf16.gmra.mxu0 %v176
  %v222 = vpop.f32.mrf.mxu0
  %v223 = vadd.f32 %v87, %v222
  %v224 = vpop.f32.mrf.mxu0
  %v225 = vadd.f32 %v87, %v224
  %226 = vdwg.mxu0
  %p227 = scmp.eq.s32.totalorder 0, 0
  // Predicated region
  $region18: #{_forward_impl.3} parent=0 // pred_check
    %p228 = pneg %p227
  $region19: #{_forward_impl.3} parent=0 // pred_check_branch
    %230 = sbr.rel (%p228) target = $region21
  $region20: #{_forward_impl.3} parent=0 // pred_region
    %231 = vst [vmem:[%s4] sm:$0xff] 0.0
    %232 = vst [vmem:[%s4 + $0x8] sm:$0xff] 0.0
  $region21: #{_forward_impl.3} parent=0 // pred_fallthru
    _
  %v233 = vld [vmem:[%s4] sm:$0xff]
  %234 = vmatpush.msra.mxu0 %v225
  %235 = vmatpush.msra.mxu0 %v223
  %236 = vmatpush.msra.mxu0 %v220
  %237 = vmatpush.msra.mxu0 %v218
  %238 = vmatpush.msra.mxu0 %v215
  %239 = vmatpush.msra.mxu0 %v213
  %240 = vmatpush.msra.mxu0 %v210
  %241 = vmatpush.msra.mxu0 %v208
  %242 = vmatpush.msra.mxu0 %v205
  %243 = vmatpush.msra.mxu0 %v203
  %244 = vmatpush.msra.mxu0 %v200
  %245 = vmatpush.msra.mxu0 %v198
  %246 = vmatpush.msra.mxu0 %v195
  %247 = vmatpush.msra.mxu0 %v193
  %248 = vmatpush.msra.mxu0 %v190
  %249 = vmatpush.msra.mxu0 %v188
  %250 = vmatmul.f32.gmra.mxu0 %v60
  %v251 = vpop.f32.mrf.mxu0
  %v252 = vadd.f32 0.0, %v251
  %253 = vdwg.mxu0
  %v254 = vadd.f32 %v233, %v252
  %255 = vst [vmem:[%s4] sm:$0xff] %v254
  %v256 = vld [vmem:[%s4 + $0x8] sm:$0xff]
  %v257 = vmul.f32 %v188, %v188
  %v258 = vmul.f32 %v190, %v190
  %v259 = vmul.f32 %v193, %v193
  %v260 = vmul.f32 %v195, %v195
  %v261 = vmul.f32 %v198, %v198
  %v262 = vmul.f32 %v200, %v200
  %v263 = vmul.f32 %v203, %v203
  %v264 = vmul.f32 %v205, %v205
  %v265 = vmul.f32 %v208, %v208
  %v266 = vmul.f32 %v210, %v210
  %v267 = vmul.f32 %v213, %v213
  %v268 = vmul.f32 %v215, %v215
  %v269 = vmul.f32 %v218, %v218
  %v270 = vmul.f32 %v220, %v220
  %v271 = vmul.f32 %v223, %v223
  %v272 = vmul.f32 %v225, %v225
  %273 = vmatpush.msra.mxu0 %v272
  %274 = vmatpush.msra.mxu0 %v271
  %275 = vmatpush.msra.mxu0 %v270
  %276 = vmatpush.msra.mxu0 %v269
  %277 = vmatpush.msra.mxu0 %v268
  %278 = vmatpush.msra.mxu0 %v267
  %279 = vmatpush.msra.mxu0 %v266
  %280 = vmatpush.msra.mxu0 %v265
  %281 = vmatpush.msra.mxu0 %v264
  %282 = vmatpush.msra.mxu0 %v263
  %283 = vmatpush.msra.mxu0 %v262
  %284 = vmatpush.msra.mxu0 %v261
  %285 = vmatpush.msra.mxu0 %v260
  %286 = vmatpush.msra.mxu0 %v259
  %287 = vmatpush.msra.mxu0 %v258
  %288 = vmatpush.msra.mxu0 %v257
  %289 = vmatmul.f32.gmra.mxu0 %v60
  %v290 = vpop.f32.mrf.mxu0
  %v291 = vadd.f32 0.0, %v290
  %292 = vdwg.mxu0
  %v293 = vadd.f32 %v256, %v291
  %294 = vst [vmem:[%s4 + $0x8] sm:$0xff] %v293
  // Predicated region
  $region22: #{_forward_impl.3} parent=0 // pred_check
    _
  $region23: #{_forward_impl.3} parent=0 // pred_check_branch
    %296 = sbr.rel (0) target = $region25
  $region24: #{_forward_impl.3} parent=0 // pred_region
    _
  $region25: #{_forward_impl.3} parent=0 // pred_fallthru
    _
  // Predicated region
  $region26: #{_forward_impl.3} parent=0 // pred_check
    _
  $region27: #{_forward_impl.3} parent=0 // pred_check_branch
    %298 = sbr.rel (0) target = $region29
  $region28: #{_forward_impl.3} parent=0 // pred_region
    _
  $region29: #{_forward_impl.3} parent=0 // pred_fallthru
    _

// kernel: _forward_impl.4
$region0: #{_forward_impl.4}
  #allocation0 [shape = 'u32[]', space=smem, size = 0x4, offset = 0x4, fixed_abs, tag = 'smem constant byte address 0x4 - core index']
  #allocation1 [shape = 'u32[72,128]{1,0:T(1,128)}', space=vmem, size = 0x9000, scoped, tag = 'internal scratch']
  %s0 = inlined_call_operand.vmem [shape: bf16[128,64], index: 0, kind: input, shape index: {}]
  %s1 = inlined_call_operand.vmem [shape: s32[1,1,128], index: 1, kind: input, shape index: {}]
  %s2 = inlined_call_operand.vmem [shape: bf16[64,128], index: 2, kind: input, shape index: {}]
  %s3 = inlined_call_operand.vmem [shape: f32[1,128], index: 3, kind: input, shape index: {}]
  %s4 = inlined_call_operand.vmem [shape: f32[8,256], index: 4, kind: input, shape index: {}]
  %s5 = inlined_call_operand.vmem [shape: bf16[128,128], index: 5, kind: input, shape index: {}]
  %s6 = inlined_call_operand.vmem [shape: f32[1,128], index: 6, kind: input, shape index: {}]
  %s7 = inlined_call_operand.vmem [shape: f32[1,8,256], index: 7, kind: output, shape index: {}]
  %s8 = sld [smem:[#allocation0]]
  $region42: #{_forward_impl.4} parent=0
    _
  %s10 = ssub.s32 1, %s8
  %s11 = scalar_select 0, %s10, %s8
  // Predicated region
  $region2: #{_forward_impl.4} parent=0 // pred_check
    _
  $region3: #{_forward_impl.4} parent=0 // pred_check_branch
    %13 = sbr.rel (0) target = $region5
  $region4: #{_forward_impl.4} parent=0 // pred_region
    %s14 = sadd.s32 0, 0
    %s15 = smul.u32 16, %s14
    %p16 = scmp.lt.s32.totalorder %s15, 15
    %s17 = scalar_select %p16, %s15, 15
    %s18 = smul.addr %s17, 4
    %s19 = scalar_lea.vmem %s0, %s18
    %s20 = sadd.s32 0, 0
    %s21 = smul.u32 16, %s20
  $region5: #{_forward_impl.4} parent=0 // pred_fallthru
    _
  // Predicated region
  $region6: #{_forward_impl.4} parent=0 // pred_check
    _
  $region7: #{_forward_impl.4} parent=0 // pred_check_branch
    %23 = sbr.rel (0) target = $region9
  $region8: #{_forward_impl.4} parent=0 // pred_region
    %s24 = sadd.s32 0, 0
    %p25 = scmp.lt.s32.totalorder %s24, 0
    %s26 = scalar_select %p25, %s24, 0
    %s27 = scalar_lea.vmem %s1, %s26
    %s28 = sadd.s32 0, 0
  $region9: #{_forward_impl.4} parent=0 // pred_fallthru
    _
  // Predicated region
  $region10: #{_forward_impl.4} parent=0 // pred_check
    _
  $region11: #{_forward_impl.4} parent=0 // pred_check_branch
    %30 = sbr.rel (0) target = $region13
  $region12: #{_forward_impl.4} parent=0 // pred_region
    _
  $region13: #{_forward_impl.4} parent=0 // pred_fallthru
    _
  // Predicated region
  $region14: #{_forward_impl.4} parent=0 // pred_check
    _
  $region15: #{_forward_impl.4} parent=0 // pred_check_branch
    %32 = sbr.rel (0) target = $region17
  $region16: #{_forward_impl.4} parent=0 // pred_region
    _
  $region17: #{_forward_impl.4} parent=0 // pred_fallthru
    _
  // Predicated region
  $region18: #{_forward_impl.4} parent=0 // pred_check
    _
  $region19: #{_forward_impl.4} parent=0 // pred_check_branch
    %34 = sbr.rel (0) target = $region21
  $region20: #{_forward_impl.4} parent=0 // pred_region
    _
  $region21: #{_forward_impl.4} parent=0 // pred_fallthru
    _
  // Predicated region
  $region22: #{_forward_impl.4} parent=0 // pred_check
    _
  $region23: #{_forward_impl.4} parent=0 // pred_check_branch
    %36 = sbr.rel (0) target = $region25
  $region24: #{_forward_impl.4} parent=0 // pred_region
    _
  $region25: #{_forward_impl.4} parent=0 // pred_fallthru
    _
  // Predicated region
  $region26: #{_forward_impl.4} parent=0 // pred_check
    _
  $region27: #{_forward_impl.4} parent=0 // pred_check_branch
    %38 = sbr.rel (0) target = $region29
  $region28: #{_forward_impl.4} parent=0 // pred_region
    _
  $region29: #{_forward_impl.4} parent=0 // pred_fallthru
    _
  %s39 = sadd.s32 0, 0
  %s40 = smul.u32 16, %s39
  %p41 = scmp.lt.s32.totalorder %s40, 15
  %s42 = scalar_select %p41, %s40, 15
  %s43 = smul.addr %s42, 4
  %s44 = scalar_lea.vmem %s0, %s43
  %s45 = sadd.s32 0, 0
  %p46 = scmp.lt.s32.totalorder %s45, 0
  %s47 = scalar_select %p46, %s45, 0
  %s48 = scalar_lea.vmem %s1, %s47
  %s49 = sadd.s32 0, 0
  %s50 = smul.u32 16, %s49
  %p51 = scmp.lt.s32.totalorder %s50, 15
  %s52 = scalar_select %p51, %s50, 15
  %s53 = smul.addr %s52, 4
  %s54 = scalar_lea.vmem %s0, %s53
  %s55 = sadd.s32 0, 0
  %s56 = smul.u32 16, %s55
  %s57 = sadd.s32 0, 0
  %p58 = scmp.lt.s32.totalorder %s57, 0
  %s59 = scalar_select %p58, %s57, 0
  %s60 = scalar_lea.vmem %s1, %s59
  %s61 = sadd.s32 0, 0
  %v63 = vld [vmem:[%s60] sm:$0x1]
  %v64 = vlaneseq
  %v65 = vshrl.u32 %v64, 7
  %v66 = vperm.slane %v63, 0
  %vm67 = vcmp.eq.s32.totalorder %v65, %v66
  %v68 = vsel %vm67, 1, 0
  %v69 = vcvt.s32.f32 %v68
  %v70 = vld [vmem:[%s54] sm:$0xf]
  %v71 = vld [vmem:[%s54 + $0x4] sm:$0xf]
  %v72 = vld [vmem:[%s54 + $0x8] sm:$0xf]
  %v73 = vld [vmem:[%s54 + $0xc] sm:$0xf]
  %v74 = vld [vmem:[%s54 + $0x10] sm:$0xf]
  %v75 = vld [vmem:[%s54 + $0x14] sm:$0xf]
  %v76 = vld [vmem:[%s54 + $0x18] sm:$0xf]
  %v77 = vld [vmem:[%s54 + $0x1c] sm:$0xf]
  %v78 = vld [vmem:[%s54 + $0x20] sm:$0xf]
  %v79 = vld [vmem:[%s54 + $0x24] sm:$0xf]
  %v80 = vld [vmem:[%s54 + $0x28] sm:$0xf]
  %v81 = vld [vmem:[%s54 + $0x2c] sm:$0xf]
  %v82 = vld [vmem:[%s54 + $0x30] sm:$0xf]
  %v83 = vld [vmem:[%s54 + $0x34] sm:$0xf]
  %v84 = vld [vmem:[%s54 + $0x38] sm:$0xf]
  %v85 = vld [vmem:[%s54 + $0x3c] sm:$0xf]
  %v86 = vld [vmem:[%s2] sm:$0xf]
  %v87 = vld [vmem:[%s2 + $0x4] sm:$0xf]
  %v88 = vld [vmem:[%s2 + $0x8] sm:$0xf]
  %v89 = vld [vmem:[%s2 + $0xc] sm:$0xf]
  %v90 = vld [vmem:[%s2 + $0x10] sm:$0xf]
  %v91 = vld [vmem:[%s2 + $0x14] sm:$0xf]
  %v92 = vld [vmem:[%s2 + $0x18] sm:$0xf]
  %v93 = vld [vmem:[%s2 + $0x1c] sm:$0xf]
  %v94 = vld [vmem:[%s3] sm:$0x1]
  %v96 = vperm.slane %v94, 0
  %v114 = vunpack.c.l.b16 %v70
  %v115 = vunpack.c.l.b16 %v71
  %v116 = vunpack.c.l.b16 %v72
  %v117 = vunpack.c.l.b16 %v73
  %v118 = vunpack.c.l.b16 %v74
  %v119 = vunpack.c.l.b16 %v75
  %v120 = vunpack.c.l.b16 %v76
  %v121 = vunpack.c.l.b16 %v77
  %v122 = vunpack.c.l.b16 %v78
  %v123 = vunpack.c.l.b16 %v79
  %v124 = vunpack.c.l.b16 %v80
  %v125 = vunpack.c.l.b16 %v81
  %v126 = vunpack.c.l.b16 %v82
  %v127 = vunpack.c.l.b16 %v83
  %v128 = vunpack.c.l.b16 %v84
  %v129 = vunpack.c.l.b16 %v85
  %v130 = vpack.c.b16 %v115, %v114
  %v131 = vpack.c.b16 %v117, %v116
  %v132 = vpack.c.b16 %v119, %v118
  %v133 = vpack.c.b16 %v121, %v120
  %v134 = vpack.c.b16 %v123, %v122
  %v135 = vpack.c.b16 %v125, %v124
  %v136 = vpack.c.b16 %v127, %v126
  %v137 = vpack.c.b16 %v129, %v128
  %v146 = vunpack.c.l.b16 %v86
  %v147 = vunpack.c.l.b16 %v87
  %v148 = vunpack.c.l.b16 %v88
  %v149 = vunpack.c.l.b16 %v89
  %v150 = vunpack.c.l.b16 %v90
  %v151 = vunpack.c.l.b16 %v91
  %v152 = vunpack.c.l.b16 %v92
  %v153 = vunpack.c.l.b16 %v93
  %v154 = vpack.c.b16 %v147, %v146
  %v155 = vpack.c.b16 %v149, %v148
  %v156 = vpack.c.b16 %v151, %v150
  %v157 = vpack.c.b16 %v153, %v152
  %vm162 = vcmask 523264
  %v164 = vsel %vm162, %v130, 0
  %v167 = vsel %vm162, %v131, 0
  %v170 = vsel %vm162, %v132, 0
  %v173 = vsel %vm162, %v133, 0
  %v176 = vsel %vm162, %v134, 0
  %v179 = vsel %vm162, %v135, 0
  %v182 = vsel %vm162, %v136, 0
  %v185 = vsel %vm162, %v137, 0
  %187 = vmatpush.bf16.msra.mxu0 0
  %188 = vmatpush.bf16.msra.mxu0 0
  %189 = vmatpush.bf16.msra.mxu0 0
  %190 = vmatpush.bf16.msra.mxu0 0
  %191 = vmatpush.bf16.msra.mxu0 %v157
  %192 = vmatpush.bf16.msra.mxu0 %v156
  %193 = vmatpush.bf16.msra.mxu0 %v155
  %194 = vmatpush.bf16.msra.mxu0 %v154
  %195 = vmatmul.bf16.gmra.mxu0 %v164
  %v196 = vpop.f32.mrf.mxu0
  %v197 = vadd.f32 %v96, %v196
  %v198 = vpop.f32.mrf.mxu0
  %v199 = vadd.f32 %v96, %v198
  %200 = vmatmul.bf16.gmra.mxu0 %v167
  %v201 = vpop.f32.mrf.mxu0
  %v202 = vadd.f32 %v96, %v201
  %v203 = vpop.f32.mrf.mxu0
  %v204 = vadd.f32 %v96, %v203
  %205 = vmatmul.bf16.gmra.mxu0 %v170
  %v206 = vpop.f32.mrf.mxu0
  %v207 = vadd.f32 %v96, %v206
  %v208 = vpop.f32.mrf.mxu0
  %v209 = vadd.f32 %v96, %v208
  %210 = vmatmul.bf16.gmra.mxu0 %v173
  %v211 = vpop.f32.mrf.mxu0
  %v212 = vadd.f32 %v96, %v211
  %v213 = vpop.f32.mrf.mxu0
  %v214 = vadd.f32 %v96, %v213
  %215 = vmatmul.bf16.gmra.mxu0 %v176
  %v216 = vpop.f32.mrf.mxu0
  %v217 = vadd.f32 %v96, %v216
  %v218 = vpop.f32.mrf.mxu0
  %v219 = vadd.f32 %v96, %v218
  %220 = vmatmul.bf16.gmra.mxu0 %v179
  %v221 = vpop.f32.mrf.mxu0
  %v222 = vadd.f32 %v96, %v221
  %v223 = vpop.f32.mrf.mxu0
  %v224 = vadd.f32 %v96, %v223
  %225 = vmatmul.bf16.gmra.mxu0 %v182
  %v226 = vpop.f32.mrf.mxu0
  %v227 = vadd.f32 %v96, %v226
  %v228 = vpop.f32.mrf.mxu0
  %v229 = vadd.f32 %v96, %v228
  %230 = vmatmul.bf16.gmra.mxu0 %v185
  %v231 = vpop.f32.mrf.mxu0
  %v232 = vadd.f32 %v96, %v231
  %v233 = vpop.f32.mrf.mxu0
  %v234 = vadd.f32 %v96, %v233
  %235 = vdwg.mxu0
  %v236 = vld [vmem:[%s4] sm:$0xff]
  %v237 = vld [vmem:[%s4 + $0x8] sm:$0xff]
  %238 = vxpose.xlu0.b32.start [1/16] %v69, 128
  %239 = vxpose.xlu0.b32.cont [2/16] 0.0, 128
  %240 = vxpose.xlu0.b32.cont [3/16] 0.0, 128
  %241 = vxpose.xlu0.b32.cont [4/16] 0.0, 128
  %242 = vxpose.xlu0.b32.cont [5/16] 0.0, 128
  %243 = vxpose.xlu0.b32.cont [6/16] 0.0, 128
  %244 = vxpose.xlu0.b32.cont [7/16] 0.0, 128
  %245 = vxpose.xlu0.b32.cont [8/16] 0.0, 128
  %246 = vxpose.xlu0.b32.cont [9/16] 0.0, 128
  %247 = vxpose.xlu0.b32.cont [10/16] 0.0, 128
  %248 = vxpose.xlu0.b32.cont [11/16] 0.0, 128
  %249 = vxpose.xlu0.b32.cont [12/16] 0.0, 128
  %250 = vxpose.xlu0.b32.cont [13/16] 0.0, 128
  %251 = vxpose.xlu0.b32.cont [14/16] 0.0, 128
  %252 = vxpose.xlu0.b32.cont [15/16] 0.0, 128
  %253 = vxpose.xlu0.b32.end [16/16] 0.0, 128
  %v254 = vpop.trf.xlu0
  %v255 = vpop.trf.xlu0
  %v256 = vpop.trf.xlu0
  %v257 = vpop.trf.xlu0
  %v258 = vpop.trf.xlu0
  %v259 = vpop.trf.xlu0
  %v260 = vpop.trf.xlu0
  %v261 = vpop.trf.xlu0
  %v262 = vpop.trf.xlu0
  %v263 = vpop.trf.xlu0
  %v264 = vpop.trf.xlu0
  %v265 = vpop.trf.xlu0
  %v266 = vpop.trf.xlu0
  %v267 = vpop.trf.xlu0
  %v268 = vpop.trf.xlu0
  %v269 = vpop.trf.xlu0
  %vm270 = vcmask 64512
  %v272 = vsel %vm270, %v254, 0
  %v275 = vsel %vm270, %v255, 0
  %v278 = vsel %vm270, %v256, 0
  %v281 = vsel %vm270, %v257, 0
  %v284 = vsel %vm270, %v258, 0
  %v287 = vsel %vm270, %v259, 0
  %v290 = vsel %vm270, %v260, 0
  %v293 = vsel %vm270, %v261, 0
  %v296 = vsel %vm270, %v262, 0
  %v299 = vsel %vm270, %v263, 0
  %v302 = vsel %vm270, %v264, 0
  %v305 = vsel %vm270, %v265, 0
  %v308 = vsel %vm270, %v266, 0
  %v311 = vsel %vm270, %v267, 0
  %v314 = vsel %vm270, %v268, 0
  %v317 = vsel %vm270, %v269, 0
  %319 = vmatpush.msra.mxu0 0.0
  %320 = vmatpush.msra.mxu0 0.0
  %321 = vmatpush.msra.mxu0 0.0
  %322 = vmatpush.msra.mxu0 0.0
  %323 = vmatpush.msra.mxu0 0.0
  %324 = vmatpush.msra.mxu0 0.0
  %325 = vmatpush.msra.mxu0 0.0
  %326 = vmatpush.msra.mxu0 0.0
  %327 = vmatpush.msra.mxu0 0.0
  %328 = vmatpush.msra.mxu0 0.0
  %329 = vmatpush.msra.mxu0 0.0
  %330 = vmatpush.msra.mxu0 0.0
  %331 = vmatpush.msra.mxu0 0.0
  %332 = vmatpush.msra.mxu0 0.0
  %333 = vmatpush.msra.mxu0 0.0
  %334 = vmatpush.msra.mxu0 %v236
  %335 = vmatmul.f32.gmra.mxu0 %v272
  %v336 = vpop.f32.mrf.mxu0
  %v337 = vadd.f32 0.0, %v336
  %338 = vmatmul.f32.gmra.mxu0 %v275
  %v339 = vpop.f32.mrf.mxu0
  %v340 = vadd.f32 0.0, %v339
  %341 = vmatmul.f32.gmra.mxu0 %v278
  %v342 = vpop.f32.mrf.mxu0
  %v343 = vadd.f32 0.0, %v342
  %344 = vmatmul.f32.gmra.mxu0 %v281
  %v345 = vpop.f32.mrf.mxu0
  %v346 = vadd.f32 0.0, %v345
  %347 = vmatmul.f32.gmra.mxu0 %v284
  %v348 = vpop.f32.mrf.mxu0
  %v349 = vadd.f32 0.0, %v348
  %350 = vmatmul.f32.gmra.mxu0 %v287
  %v351 = vpop.f32.mrf.mxu0
  %v352 = vadd.f32 0.0, %v351
  %353 = vmatmul.f32.gmra.mxu0 %v290
  %v354 = vpop.f32.mrf.mxu0
  %v355 = vadd.f32 0.0, %v354
  %356 = vmatmul.f32.gmra.mxu0 %v293
  %v357 = vpop.f32.mrf.mxu0
  %v358 = vadd.f32 0.0, %v357
  %359 = vmatmul.f32.gmra.mxu0 %v296
  %v360 = vpop.f32.mrf.mxu0
  %v361 = vadd.f32 0.0, %v360
  %362 = vmatmul.f32.gmra.mxu0 %v299
  %v363 = vpop.f32.mrf.mxu0
  %v364 = vadd.f32 0.0, %v363
  %365 = vmatmul.f32.gmra.mxu0 %v302
  %v366 = vpop.f32.mrf.mxu0
  %v367 = vadd.f32 0.0, %v366
  %368 = vmatmul.f32.gmra.mxu0 %v305
  %v369 = vpop.f32.mrf.mxu0
  %v370 = vadd.f32 0.0, %v369
  %371 = vmatmul.f32.gmra.mxu0 %v308
  %v372 = vpop.f32.mrf.mxu0
  %v373 = vadd.f32 0.0, %v372
  %374 = vmatmul.f32.gmra.mxu0 %v311
  %v375 = vpop.f32.mrf.mxu0
  %v376 = vadd.f32 0.0, %v375
  %377 = vmatmul.f32.gmra.mxu0 %v314
  %v378 = vpop.f32.mrf.mxu0
  %v379 = vadd.f32 0.0, %v378
  %380 = vmatmul.f32.gmra.mxu0 %v317
  %v381 = vpop.f32.mrf.mxu0
  %v382 = vadd.f32 0.0, %v381
  %383 = vdwg.mxu0
  %384 = vmatpush.msra.mxu0 0.0
  %385 = vmatpush.msra.mxu0 0.0
  %386 = vmatpush.msra.mxu0 0.0
  %387 = vmatpush.msra.mxu0 0.0
  %388 = vmatpush.msra.mxu0 0.0
  %389 = vmatpush.msra.mxu0 0.0
  %390 = vmatpush.msra.mxu0 0.0
  %391 = vmatpush.msra.mxu0 0.0
  %392 = vmatpush.msra.mxu0 0.0
  %393 = vmatpush.msra.mxu0 0.0
  %394 = vmatpush.msra.mxu0 0.0
  %395 = vmatpush.msra.mxu0 0.0
  %396 = vmatpush.msra.mxu0 0.0
  %397 = vmatpush.msra.mxu0 0.0
  %398 = vmatpush.msra.mxu0 0.0
  %399 = vmatpush.msra.mxu0 %v237
  %400 = vmatmul.f32.gmra.mxu0 %v272
  %v401 = vpop.f32.mrf.mxu0
  %v402 = vadd.f32 0.0, %v401
  %403 = vmatmul.f32.gmra.mxu0 %v275
  %v404 = vpop.f32.mrf.mxu0
  %v405 = vadd.f32 0.0, %v404
  %406 = vmatmul.f32.gmra.mxu0 %v278
  %v407 = vpop.f32.mrf.mxu0
  %v408 = vadd.f32 0.0, %v407
  %409 = vmatmul.f32.gmra.mxu0 %v281
  %v410 = vpop.f32.mrf.mxu0
  %v411 = vadd.f32 0.0, %v410
  %412 = vmatmul.f32.gmra.mxu0 %v284
  %v413 = vpop.f32.mrf.mxu0
  %v414 = vadd.f32 0.0, %v413
  %415 = vmatmul.f32.gmra.mxu0 %v287
  %v416 = vpop.f32.mrf.mxu0
  %v417 = vadd.f32 0.0, %v416
  %418 = vmatmul.f32.gmra.mxu0 %v290
  %v419 = vpop.f32.mrf.mxu0
  %v420 = vadd.f32 0.0, %v419
  %421 = vmatmul.f32.gmra.mxu0 %v293
  %v422 = vpop.f32.mrf.mxu0
  %v423 = vadd.f32 0.0, %v422
  %424 = vmatmul.f32.gmra.mxu0 %v296
  %v425 = vpop.f32.mrf.mxu0
  %v426 = vadd.f32 0.0, %v425
  %427 = vmatmul.f32.gmra.mxu0 %v299
  %v428 = vpop.f32.mrf.mxu0
  %v429 = vadd.f32 0.0, %v428
  %430 = vmatmul.f32.gmra.mxu0 %v302
  %v431 = vpop.f32.mrf.mxu0
  %v432 = vadd.f32 0.0, %v431
  %433 = vmatmul.f32.gmra.mxu0 %v305
  %v434 = vpop.f32.mrf.mxu0
  %v435 = vadd.f32 0.0, %v434
  %436 = vmatmul.f32.gmra.mxu0 %v308
  %v437 = vpop.f32.mrf.mxu0
  %v438 = vadd.f32 0.0, %v437
  %439 = vmatmul.f32.gmra.mxu0 %v311
  %v440 = vpop.f32.mrf.mxu0
  %v441 = vadd.f32 0.0, %v440
  %442 = vmatmul.f32.gmra.mxu0 %v314
  %v443 = vpop.f32.mrf.mxu0
  %v444 = vadd.f32 0.0, %v443
  %445 = vmatmul.f32.gmra.mxu0 %v317
  %v446 = vpop.f32.mrf.mxu0
  %v447 = vadd.f32 0.0, %v446
  %448 = vdwg.mxu0
  %v449 = vsub.f32 %v197, %v337
  %v450 = vsub.f32 %v199, %v340
  %v451 = vsub.f32 %v202, %v343
  %v452 = vsub.f32 %v204, %v346
  %v453 = vsub.f32 %v207, %v349
  %v454 = vsub.f32 %v209, %v352
  %v455 = vsub.f32 %v212, %v355
  %v456 = vsub.f32 %v214, %v358
  %v457 = vsub.f32 %v217, %v361
  %v458 = vsub.f32 %v219, %v364
  %v459 = vsub.f32 %v222, %v367
  %v460 = vsub.f32 %v224, %v370
  %v461 = vsub.f32 %v227, %v373
  %v462 = vsub.f32 %v229, %v376
  %v463 = vsub.f32 %v232, %v379
  %v464 = vsub.f32 %v234, %v382
  %v465 = vmul.f32 %v449, %v402
  %v466 = vmul.f32 %v450, %v405
  %v467 = vmul.f32 %v451, %v408
  %v468 = vmul.f32 %v452, %v411
  %v469 = vmul.f32 %v453, %v414
  %v470 = vmul.f32 %v454, %v417
  %v471 = vmul.f32 %v455, %v420
  %v472 = vmul.f32 %v456, %v423
  %v473 = vmul.f32 %v457, %v426
  %v474 = vmul.f32 %v458, %v429
  %v475 = vmul.f32 %v459, %v432
  %v476 = vmul.f32 %v460, %v435
  %v477 = vmul.f32 %v461, %v438
  %v478 = vmul.f32 %v462, %v441
  %v479 = vmul.f32 %v463, %v444
  %v480 = vmul.f32 %v464, %v447
  %v481 = vmax.f32 %v465, 0.0
  %v482 = vmax.f32 %v466, 0.0
  %v483 = vmax.f32 %v467, 0.0
  %v484 = vmax.f32 %v468, 0.0
  %v485 = vmax.f32 %v469, 0.0
  %v486 = vmax.f32 %v470, 0.0
  %v487 = vmax.f32 %v471, 0.0
  %v488 = vmax.f32 %v472, 0.0
  %v489 = vmax.f32 %v473, 0.0
  %v490 = vmax.f32 %v474, 0.0
  %v491 = vmax.f32 %v475, 0.0
  %v492 = vmax.f32 %v476, 0.0
  %v493 = vmax.f32 %v477, 0.0
  %v494 = vmax.f32 %v478, 0.0
  %v495 = vmax.f32 %v479, 0.0
  %v496 = vmax.f32 %v480, 0.0
  %v497 = vpack.c.bf16 %v482, %v481
  %v498 = vpack.c.bf16 %v484, %v483
  %v499 = vpack.c.bf16 %v486, %v485
  %v500 = vpack.c.bf16 %v488, %v487
  %v501 = vpack.c.bf16 %v490, %v489
  %v502 = vpack.c.bf16 %v492, %v491
  %v503 = vpack.c.bf16 %v494, %v493
  %v504 = vpack.c.bf16 %v496, %v495
  %v505 = vld [vmem:[%s5] sm:$0xf]
  %v506 = vld [vmem:[%s5 + $0x4] sm:$0xf]
  %v507 = vld [vmem:[%s5 + $0x8] sm:$0xf]
  %v508 = vld [vmem:[%s5 + $0xc] sm:$0xf]
  %v509 = vld [vmem:[%s5 + $0x10] sm:$0xf]
  %v510 = vld [vmem:[%s5 + $0x14] sm:$0xf]
  %v511 = vld [vmem:[%s5 + $0x18] sm:$0xf]
  %v512 = vld [vmem:[%s5 + $0x1c] sm:$0xf]
  %v513 = vld [vmem:[%s5 + $0x20] sm:$0xf]
  %v514 = vld [vmem:[%s5 + $0x24] sm:$0xf]
  %v515 = vld [vmem:[%s5 + $0x28] sm:$0xf]
  %v516 = vld [vmem:[%s5 + $0x2c] sm:$0xf]
  %v517 = vld [vmem:[%s5 + $0x30] sm:$0xf]
  %v518 = vld [vmem:[%s5 + $0x34] sm:$0xf]
  %v519 = vld [vmem:[%s5 + $0x38] sm:$0xf]
  %v520 = vld [vmem:[%s5 + $0x3c] sm:$0xf]
  %v521 = vld [vmem:[%s6] sm:$0x1]
  %v523 = vperm.slane %v521, 0
  %v541 = vunpack.c.l.b16 %v505
  %v542 = vunpack.c.l.b16 %v506
  %v543 = vunpack.c.l.b16 %v507
  %v544 = vunpack.c.l.b16 %v508
  %v545 = vunpack.c.l.b16 %v509
  %v546 = vunpack.c.l.b16 %v510
  %v547 = vunpack.c.l.b16 %v511
  %v548 = vunpack.c.l.b16 %v512
  %v549 = vunpack.c.l.b16 %v513
  %v550 = vunpack.c.l.b16 %v514
  %v551 = vunpack.c.l.b16 %v515
  %v552 = vunpack.c.l.b16 %v516
  %v553 = vunpack.c.l.b16 %v517
  %v554 = vunpack.c.l.b16 %v518
  %v555 = vunpack.c.l.b16 %v519
  %v556 = vunpack.c.l.b16 %v520
  %v557 = vpack.c.b16 %v542, %v541
  %v558 = vpack.c.b16 %v544, %v543
  %v559 = vpack.c.b16 %v546, %v545
  %v560 = vpack.c.b16 %v548, %v547
  %v561 = vpack.c.b16 %v550, %v549
  %v562 = vpack.c.b16 %v552, %v551
  %v563 = vpack.c.b16 %v554, %v553
  %v564 = vpack.c.b16 %v556, %v555
  %573 = vmatpush.bf16.msra.mxu0 %v564
  %574 = vmatpush.bf16.msra.mxu0 %v563
  %575 = vmatpush.bf16.msra.mxu0 %v562
  %576 = vmatpush.bf16.msra.mxu0 %v561
  %577 = vmatpush.bf16.msra.mxu0 %v560
  %578 = vmatpush.bf16.msra.mxu0 %v559
  %579 = vmatpush.bf16.msra.mxu0 %v558
  %580 = vmatpush.bf16.msra.mxu0 %v557
  %581 = vmatmul.bf16.gmra.mxu0 %v497
  %v582 = vpop.f32.mrf.mxu0
  %v583 = vadd.f32 %v523, %v582
  %v584 = vpop.f32.mrf.mxu0
  %v585 = vadd.f32 %v523, %v584
  %586 = vmatmul.bf16.gmra.mxu0 %v498
  %v587 = vpop.f32.mrf.mxu0
  %v588 = vadd.f32 %v523, %v587
  %v589 = vpop.f32.mrf.mxu0
  %v590 = vadd.f32 %v523, %v589
  %591 = vmatmul.bf16.gmra.mxu0 %v499
  %v592 = vpop.f32.mrf.mxu0
  %v593 = vadd.f32 %v523, %v592
  %v594 = vpop.f32.mrf.mxu0
  %v595 = vadd.f32 %v523, %v594
  %596 = vmatmul.bf16.gmra.mxu0 %v500
  %v597 = vpop.f32.mrf.mxu0
  %v598 = vadd.f32 %v523, %v597
  %v599 = vpop.f32.mrf.mxu0
  %v600 = vadd.f32 %v523, %v599
  %601 = vmatmul.bf16.gmra.mxu0 %v501
  %v602 = vpop.f32.mrf.mxu0
  %v603 = vadd.f32 %v523, %v602
  %v604 = vpop.f32.mrf.mxu0
  %v605 = vadd.f32 %v523, %v604
  %606 = vmatmul.bf16.gmra.mxu0 %v502
  %v607 = vpop.f32.mrf.mxu0
  %v608 = vadd.f32 %v523, %v607
  %v609 = vpop.f32.mrf.mxu0
  %v610 = vadd.f32 %v523, %v609
  %611 = vmatmul.bf16.gmra.mxu0 %v503
  %v612 = vpop.f32.mrf.mxu0
  %v613 = vadd.f32 %v523, %v612
  %v614 = vpop.f32.mrf.mxu0
  %v615 = vadd.f32 %v523, %v614
  %616 = vmatmul.bf16.gmra.mxu0 %v504
  %v617 = vpop.f32.mrf.mxu0
  %v618 = vadd.f32 %v523, %v617
  %v619 = vpop.f32.mrf.mxu0
  %v620 = vadd.f32 %v523, %v619
  %621 = vdwg.mxu0
  %p622 = scmp.eq.s32.totalorder 0, 0
  // Predicated region
  $region30: #{_forward_impl.4} parent=0 // pred_check
    %p623 = pneg %p622
  $region31: #{_forward_impl.4} parent=0 // pred_check_branch
    %625 = sbr.rel (%p623) target = $region33
  $region32: #{_forward_impl.4} parent=0 // pred_region
    %626 = vst [vmem:[%s7] sm:$0xff] 0.0
    %627 = vst [vmem:[%s7 + $0x8] sm:$0xff] 0.0
  $region33: #{_forward_impl.4} parent=0 // pred_fallthru
    _
  %v628 = vld [vmem:[%s7] sm:$0xff]
  %629 = vmatpush.msra.mxu0 %v620
  %630 = vmatpush.msra.mxu0 %v618
  %631 = vmatpush.msra.mxu0 %v615
  %632 = vmatpush.msra.mxu0 %v613
  %633 = vmatpush.msra.mxu0 %v610
  %634 = vmatpush.msra.mxu0 %v608
  %635 = vmatpush.msra.mxu0 %v605
  %636 = vmatpush.msra.mxu0 %v603
  %637 = vmatpush.msra.mxu0 %v600
  %638 = vmatpush.msra.mxu0 %v598
  %639 = vmatpush.msra.mxu0 %v595
  %640 = vmatpush.msra.mxu0 %v593
  %641 = vmatpush.msra.mxu0 %v590
  %642 = vmatpush.msra.mxu0 %v588
  %643 = vmatpush.msra.mxu0 %v585
  %644 = vmatpush.msra.mxu0 %v583
  %645 = vmatmul.f32.gmra.mxu0 %v69
  %v646 = vpop.f32.mrf.mxu0
  %v647 = vadd.f32 0.0, %v646
  %648 = vdwg.mxu0
  %v649 = vadd.f32 %v628, %v647
  %650 = vst [vmem:[%s7] sm:$0xff] %v649
  %v651 = vld [vmem:[%s7 + $0x8] sm:$0xff]
  %v652 = vmul.f32 %v583, %v583
  %v653 = vmul.f32 %v585, %v585
  %v654 = vmul.f32 %v588, %v588
  %v655 = vmul.f32 %v590, %v590
  %v656 = vmul.f32 %v593, %v593
  %v657 = vmul.f32 %v595, %v595
  %v658 = vmul.f32 %v598, %v598
  %v659 = vmul.f32 %v600, %v600
  %v660 = vmul.f32 %v603, %v603
  %v661 = vmul.f32 %v605, %v605
  %v662 = vmul.f32 %v608, %v608
  %v663 = vmul.f32 %v610, %v610
  %v664 = vmul.f32 %v613, %v613
  %v665 = vmul.f32 %v615, %v615
  %v666 = vmul.f32 %v618, %v618
  %v667 = vmul.f32 %v620, %v620
  %668 = vmatpush.msra.mxu0 %v667
  %669 = vmatpush.msra.mxu0 %v666
  %670 = vmatpush.msra.mxu0 %v665
  %671 = vmatpush.msra.mxu0 %v664
  %672 = vmatpush.msra.mxu0 %v663
  %673 = vmatpush.msra.mxu0 %v662
  %674 = vmatpush.msra.mxu0 %v661
  %675 = vmatpush.msra.mxu0 %v660
  %676 = vmatpush.msra.mxu0 %v659
  %677 = vmatpush.msra.mxu0 %v658
  %678 = vmatpush.msra.mxu0 %v657
  %679 = vmatpush.msra.mxu0 %v656
  %680 = vmatpush.msra.mxu0 %v655
  %681 = vmatpush.msra.mxu0 %v654
  %682 = vmatpush.msra.mxu0 %v653
  %683 = vmatpush.msra.mxu0 %v652
  %684 = vmatmul.f32.gmra.mxu0 %v69
  %v685 = vpop.f32.mrf.mxu0
  %v686 = vadd.f32 0.0, %v685
  %687 = vdwg.mxu0
  %v688 = vadd.f32 %v651, %v686
  %689 = vst [vmem:[%s7 + $0x8] sm:$0xff] %v688
  // Predicated region
  $region34: #{_forward_impl.4} parent=0 // pred_check
    _
  $region35: #{_forward_impl.4} parent=0 // pred_check_branch
    %691 = sbr.rel (0) target = $region37
  $region36: #{_forward_impl.4} parent=0 // pred_region
    _
  $region37: #{_forward_impl.4} parent=0 // pred_fallthru
    _
  // Predicated region
  $region38: #{_forward_impl.4} parent=0 // pred_check
    _
  $region39: #{_forward_impl.4} parent=0 // pred_check_branch
    %693 = sbr.rel (0) target = $region41
  $region40: #{_forward_impl.4} parent=0 // pred_region
    _
  $region41: #{_forward_impl.4} parent=0 // pred_fallthru
    _

// kernel: _forward_impl.5
$region0: #{_forward_impl.5}
  #allocation0 [shape = 'u32[]', space=smem, size = 0x4, offset = 0x4, fixed_abs, tag = 'smem constant byte address 0x4 - core index']
  #allocation1 [shape = 'u32[72,128]{1,0:T(1,128)}', space=vmem, size = 0x9000, scoped, tag = 'internal scratch']
  #allocation2 [shape = 'f32[1,1]{1,0:T(1,128)S(6)}', space=smem, size = 0x200, scoped, tag = 'scoped memory for _forward_impl.5']
  %s0 = inlined_call_operand.vmem [shape: bf16[128,64], index: 0, kind: input, shape index: {}]
  %s1 = inlined_call_operand.vmem [shape: s32[1,1,128], index: 1, kind: input, shape index: {}]
  %s2 = inlined_call_operand.vmem [shape: bf16[64,128], index: 2, kind: input, shape index: {}]
  %s3 = inlined_call_operand.vmem [shape: f32[1,128], index: 3, kind: input, shape index: {}]
  %s4 = inlined_call_operand.vmem [shape: f32[8,256], index: 4, kind: input, shape index: {}]
  %s5 = inlined_call_operand.vmem [shape: bf16[128,128], index: 5, kind: input, shape index: {}]
  %s6 = inlined_call_operand.vmem [shape: f32[1,128], index: 6, kind: input, shape index: {}]
  %s7 = inlined_call_operand.vmem [shape: f32[8,256], index: 7, kind: input, shape index: {}]
  %s8 = inlined_call_operand.vmem [shape: f32[1,128], index: 8, kind: input, shape index: {}]
  %s9 = inlined_call_operand.<no memory space> [shape: f32[1,1], index: 9, kind: input, shape index: {}]
  %s10 = inlined_call_operand.vmem [shape: f32[1,1,128], index: 10, kind: output, shape index: {}]
  %s11 = sld [smem:[#allocation0]]
  $region50: #{_forward_impl.5} parent=0
    _
  %s13 = ssub.s32 1, %s11
  %s14 = scalar_select 0, %s13, %s11
  %15 = sst [smem:[#allocation2]] %s9
  // Predicated region
  $region2: #{_forward_impl.5} parent=0 // pred_check
    _
  $region3: #{_forward_impl.5} parent=0 // pred_check_branch
    %17 = sbr.rel (0) target = $region5
  $region4: #{_forward_impl.5} parent=0 // pred_region
    _
  $region5: #{_forward_impl.5} parent=0 // pred_fallthru
    _
  // Predicated region
  $region6: #{_forward_impl.5} parent=0 // pred_check
    _
  $region7: #{_forward_impl.5} parent=0 // pred_check_branch
    %19 = sbr.rel (0) target = $region9
  $region8: #{_forward_impl.5} parent=0 // pred_region
    _
  $region9: #{_forward_impl.5} parent=0 // pred_fallthru
    _
  // Predicated region
  $region10: #{_forward_impl.5} parent=0 // pred_check
    _
  $region11: #{_forward_impl.5} parent=0 // pred_check_branch
    %21 = sbr.rel (0) target = $region13
  $region12: #{_forward_impl.5} parent=0 // pred_region
    _
  $region13: #{_forward_impl.5} parent=0 // pred_fallthru
    _
  // Predicated region
  $region14: #{_forward_impl.5} parent=0 // pred_check
    _
  $region15: #{_forward_impl.5} parent=0 // pred_check_branch
    %23 = sbr.rel (0) target = $region17
  $region16: #{_forward_impl.5} parent=0 // pred_region
    _
  $region17: #{_forward_impl.5} parent=0 // pred_fallthru
    _
  // Predicated region
  $region18: #{_forward_impl.5} parent=0 // pred_check
    _
  $region19: #{_forward_impl.5} parent=0 // pred_check_branch
    %25 = sbr.rel (0) target = $region21
  $region20: #{_forward_impl.5} parent=0 // pred_region
    _
  $region21: #{_forward_impl.5} parent=0 // pred_fallthru
    _
  // Predicated region
  $region22: #{_forward_impl.5} parent=0 // pred_check
    _
  $region23: #{_forward_impl.5} parent=0 // pred_check_branch
    %27 = sbr.rel (0) target = $region25
  $region24: #{_forward_impl.5} parent=0 // pred_region
    _
  $region25: #{_forward_impl.5} parent=0 // pred_fallthru
    _
  // Predicated region
  $region26: #{_forward_impl.5} parent=0 // pred_check
    _
  $region27: #{_forward_impl.5} parent=0 // pred_check_branch
    %29 = sbr.rel (0) target = $region29
  $region28: #{_forward_impl.5} parent=0 // pred_region
    _
  $region29: #{_forward_impl.5} parent=0 // pred_fallthru
    _
  // Predicated region
  $region30: #{_forward_impl.5} parent=0 // pred_check
    _
  $region31: #{_forward_impl.5} parent=0 // pred_check_branch
    %31 = sbr.rel (0) target = $region33
  $region32: #{_forward_impl.5} parent=0 // pred_region
    _
  $region33: #{_forward_impl.5} parent=0 // pred_fallthru
    _
  // Predicated region
  $region34: #{_forward_impl.5} parent=0 // pred_check
    _
  $region35: #{_forward_impl.5} parent=0 // pred_check_branch
    %33 = sbr.rel (0) target = $region37
  $region36: #{_forward_impl.5} parent=0 // pred_region
    _
  $region37: #{_forward_impl.5} parent=0 // pred_fallthru
    _
  // Predicated region
  $region38: #{_forward_impl.5} parent=0 // pred_check
    _
  $region39: #{_forward_impl.5} parent=0 // pred_check_branch
    %35 = sbr.rel (0) target = $region41
  $region40: #{_forward_impl.5} parent=0 // pred_region
    _
  $region41: #{_forward_impl.5} parent=0 // pred_fallthru
    _
  %v37 = vld [vmem:[%s1] sm:$0x1]
  %v38 = vlaneseq
  %v39 = vshrl.u32 %v38, 7
  %v40 = vperm.slane %v37, 0
  %vm41 = vcmp.eq.s32.totalorder %v39, %v40
  %v42 = vsel %vm41, 1, 0
  %v43 = vcvt.s32.f32 %v42
  %v44 = vld [vmem:[%s0] sm:$0xf]
  %v45 = vld [vmem:[%s0 + $0x4] sm:$0xf]
  %v46 = vld [vmem:[%s0 + $0x8] sm:$0xf]
  %v47 = vld [vmem:[%s0 + $0xc] sm:$0xf]
  %v48 = vld [vmem:[%s0 + $0x10] sm:$0xf]
  %v49 = vld [vmem:[%s0 + $0x14] sm:$0xf]
  %v50 = vld [vmem:[%s0 + $0x18] sm:$0xf]
  %v51 = vld [vmem:[%s0 + $0x1c] sm:$0xf]
  %v52 = vld [vmem:[%s0 + $0x20] sm:$0xf]
  %v53 = vld [vmem:[%s0 + $0x24] sm:$0xf]
  %v54 = vld [vmem:[%s0 + $0x28] sm:$0xf]
  %v55 = vld [vmem:[%s0 + $0x2c] sm:$0xf]
  %v56 = vld [vmem:[%s0 + $0x30] sm:$0xf]
  %v57 = vld [vmem:[%s0 + $0x34] sm:$0xf]
  %v58 = vld [vmem:[%s0 + $0x38] sm:$0xf]
  %v59 = vld [vmem:[%s0 + $0x3c] sm:$0xf]
  %v60 = vld [vmem:[%s2] sm:$0xf]
  %v61 = vld [vmem:[%s2 + $0x4] sm:$0xf]
  %v62 = vld [vmem:[%s2 + $0x8] sm:$0xf]
  %v63 = vld [vmem:[%s2 + $0xc] sm:$0xf]
  %v64 = vld [vmem:[%s2 + $0x10] sm:$0xf]
  %v65 = vld [vmem:[%s2 + $0x14] sm:$0xf]
  %v66 = vld [vmem:[%s2 + $0x18] sm:$0xf]
  %v67 = vld [vmem:[%s2 + $0x1c] sm:$0xf]
  %v68 = vld [vmem:[%s3] sm:$0x1]
  %v70 = vperm.slane %v68, 0
  %v88 = vunpack.c.l.b16 %v44
  %v89 = vunpack.c.l.b16 %v45
  %v90 = vunpack.c.l.b16 %v46
  %v91 = vunpack.c.l.b16 %v47
  %v92 = vunpack.c.l.b16 %v48
  %v93 = vunpack.c.l.b16 %v49
  %v94 = vunpack.c.l.b16 %v50
  %v95 = vunpack.c.l.b16 %v51
  %v96 = vunpack.c.l.b16 %v52
  %v97 = vunpack.c.l.b16 %v53
  %v98 = vunpack.c.l.b16 %v54
  %v99 = vunpack.c.l.b16 %v55
  %v100 = vunpack.c.l.b16 %v56
  %v101 = vunpack.c.l.b16 %v57
  %v102 = vunpack.c.l.b16 %v58
  %v103 = vunpack.c.l.b16 %v59
  %v104 = vpack.c.b16 %v89, %v88
  %v105 = vpack.c.b16 %v91, %v90
  %v106 = vpack.c.b16 %v93, %v92
  %v107 = vpack.c.b16 %v95, %v94
  %v108 = vpack.c.b16 %v97, %v96
  %v109 = vpack.c.b16 %v99, %v98
  %v110 = vpack.c.b16 %v101, %v100
  %v111 = vpack.c.b16 %v103, %v102
  %v120 = vunpack.c.l.b16 %v60
  %v121 = vunpack.c.l.b16 %v61
  %v122 = vunpack.c.l.b16 %v62
  %v123 = vunpack.c.l.b16 %v63
  %v124 = vunpack.c.l.b16 %v64
  %v125 = vunpack.c.l.b16 %v65
  %v126 = vunpack.c.l.b16 %v66
  %v127 = vunpack.c.l.b16 %v67
  %v128 = vpack.c.b16 %v121, %v120
  %v129 = vpack.c.b16 %v123, %v122
  %v130 = vpack.c.b16 %v125, %v124
  %v131 = vpack.c.b16 %v127, %v126
  %vm136 = vcmask 523264
  %v138 = vsel %vm136, %v104, 0
  %v141 = vsel %vm136, %v105, 0
  %v144 = vsel %vm136, %v106, 0
  %v147 = vsel %vm136, %v107, 0
  %v150 = vsel %vm136, %v108, 0
  %v153 = vsel %vm136, %v109, 0
  %v156 = vsel %vm136, %v110, 0
  %v159 = vsel %vm136, %v111, 0
  %161 = vmatpush.bf16.msra.mxu0 0
  %162 = vmatpush.bf16.msra.mxu0 0
  %163 = vmatpush.bf16.msra.mxu0 0
  %164 = vmatpush.bf16.msra.mxu0 0
  %165 = vmatpush.bf16.msra.mxu0 %v131
  %166 = vmatpush.bf16.msra.mxu0 %v130
  %167 = vmatpush.bf16.msra.mxu0 %v129
  %168 = vmatpush.bf16.msra.mxu0 %v128
  %169 = vmatmul.bf16.gmra.mxu0 %v138
  %v170 = vpop.f32.mrf.mxu0
  %v171 = vadd.f32 %v70, %v170
  %v172 = vpop.f32.mrf.mxu0
  %v173 = vadd.f32 %v70, %v172
  %174 = vmatmul.bf16.gmra.mxu0 %v141
  %v175 = vpop.f32.mrf.mxu0
  %v176 = vadd.f32 %v70, %v175
  %v177 = vpop.f32.mrf.mxu0
  %v178 = vadd.f32 %v70, %v177
  %179 = vmatmul.bf16.gmra.mxu0 %v144
  %v180 = vpop.f32.mrf.mxu0
  %v181 = vadd.f32 %v70, %v180
  %v182 = vpop.f32.mrf.mxu0
  %v183 = vadd.f32 %v70, %v182
  %184 = vmatmul.bf16.gmra.mxu0 %v147
  %v185 = vpop.f32.mrf.mxu0
  %v186 = vadd.f32 %v70, %v185
  %v187 = vpop.f32.mrf.mxu0
  %v188 = vadd.f32 %v70, %v187
  %189 = vmatmul.bf16.gmra.mxu0 %v150
  %v190 = vpop.f32.mrf.mxu0
  %v191 = vadd.f32 %v70, %v190
  %v192 = vpop.f32.mrf.mxu0
  %v193 = vadd.f32 %v70, %v192
  %194 = vmatmul.bf16.gmra.mxu0 %v153
  %v195 = vpop.f32.mrf.mxu0
  %v196 = vadd.f32 %v70, %v195
  %v197 = vpop.f32.mrf.mxu0
  %v198 = vadd.f32 %v70, %v197
  %199 = vmatmul.bf16.gmra.mxu0 %v156
  %v200 = vpop.f32.mrf.mxu0
  %v201 = vadd.f32 %v70, %v200
  %v202 = vpop.f32.mrf.mxu0
  %v203 = vadd.f32 %v70, %v202
  %204 = vmatmul.bf16.gmra.mxu0 %v159
  %v205 = vpop.f32.mrf.mxu0
  %v206 = vadd.f32 %v70, %v205
  %v207 = vpop.f32.mrf.mxu0
  %v208 = vadd.f32 %v70, %v207
  %209 = vdwg.mxu0
  %v210 = vld [vmem:[%s4] sm:$0xff]
  %v211 = vld [vmem:[%s4 + $0x8] sm:$0xff]
  %212 = vxpose.xlu0.b32.start [1/16] %v43, 128
  %213 = vxpose.xlu0.b32.cont [2/16] 0.0, 128
  %214 = vxpose.xlu0.b32.cont [3/16] 0.0, 128
  %215 = vxpose.xlu0.b32.cont [4/16] 0.0, 128
  %216 = vxpose.xlu0.b32.cont [5/16] 0.0, 128
  %217 = vxpose.xlu0.b32.cont [6/16] 0.0, 128
  %218 = vxpose.xlu0.b32.cont [7/16] 0.0, 128
  %219 = vxpose.xlu0.b32.cont [8/16] 0.0, 128
  %220 = vxpose.xlu0.b32.cont [9/16] 0.0, 128
  %221 = vxpose.xlu0.b32.cont [10/16] 0.0, 128
  %222 = vxpose.xlu0.b32.cont [11/16] 0.0, 128
  %223 = vxpose.xlu0.b32.cont [12/16] 0.0, 128
  %224 = vxpose.xlu0.b32.cont [13/16] 0.0, 128
  %225 = vxpose.xlu0.b32.cont [14/16] 0.0, 128
  %226 = vxpose.xlu0.b32.cont [15/16] 0.0, 128
  %227 = vxpose.xlu0.b32.end [16/16] 0.0, 128
  %v228 = vpop.trf.xlu0
  %v229 = vpop.trf.xlu0
  %v230 = vpop.trf.xlu0
  %v231 = vpop.trf.xlu0
  %v232 = vpop.trf.xlu0
  %v233 = vpop.trf.xlu0
  %v234 = vpop.trf.xlu0
  %v235 = vpop.trf.xlu0
  %v236 = vpop.trf.xlu0
  %v237 = vpop.trf.xlu0
  %v238 = vpop.trf.xlu0
  %v239 = vpop.trf.xlu0
  %v240 = vpop.trf.xlu0
  %v241 = vpop.trf.xlu0
  %v242 = vpop.trf.xlu0
  %v243 = vpop.trf.xlu0
  %vm244 = vcmask 64512
  %v246 = vsel %vm244, %v228, 0
  %v249 = vsel %vm244, %v229, 0
  %v252 = vsel %vm244, %v230, 0
  %v255 = vsel %vm244, %v231, 0
  %v258 = vsel %vm244, %v232, 0
  %v261 = vsel %vm244, %v233, 0
  %v264 = vsel %vm244, %v234, 0
  %v267 = vsel %vm244, %v235, 0
  %v270 = vsel %vm244, %v236, 0
  %v273 = vsel %vm244, %v237, 0
  %v276 = vsel %vm244, %v238, 0
  %v279 = vsel %vm244, %v239, 0
  %v282 = vsel %vm244, %v240, 0
  %v285 = vsel %vm244, %v241, 0
  %v288 = vsel %vm244, %v242, 0
  %v291 = vsel %vm244, %v243, 0
  %293 = vmatpush.msra.mxu0 0.0
  %294 = vmatpush.msra.mxu0 0.0
  %295 = vmatpush.msra.mxu0 0.0
  %296 = vmatpush.msra.mxu0 0.0
  %297 = vmatpush.msra.mxu0 0.0
  %298 = vmatpush.msra.mxu0 0.0
  %299 = vmatpush.msra.mxu0 0.0
  %300 = vmatpush.msra.mxu0 0.0
  %301 = vmatpush.msra.mxu0 0.0
  %302 = vmatpush.msra.mxu0 0.0
  %303 = vmatpush.msra.mxu0 0.0
  %304 = vmatpush.msra.mxu0 0.0
  %305 = vmatpush.msra.mxu0 0.0
  %306 = vmatpush.msra.mxu0 0.0
  %307 = vmatpush.msra.mxu0 0.0
  %308 = vmatpush.msra.mxu0 %v210
  %309 = vmatmul.f32.gmra.mxu0 %v246
  %v310 = vpop.f32.mrf.mxu0
  %v311 = vadd.f32 0.0, %v310
  %312 = vmatmul.f32.gmra.mxu0 %v249
  %v313 = vpop.f32.mrf.mxu0
  %v314 = vadd.f32 0.0, %v313
  %315 = vmatmul.f32.gmra.mxu0 %v252
  %v316 = vpop.f32.mrf.mxu0
  %v317 = vadd.f32 0.0, %v316
  %318 = vmatmul.f32.gmra.mxu0 %v255
  %v319 = vpop.f32.mrf.mxu0
  %v320 = vadd.f32 0.0, %v319
  %321 = vmatmul.f32.gmra.mxu0 %v258
  %v322 = vpop.f32.mrf.mxu0
  %v323 = vadd.f32 0.0, %v322
  %324 = vmatmul.f32.gmra.mxu0 %v261
  %v325 = vpop.f32.mrf.mxu0
  %v326 = vadd.f32 0.0, %v325
  %327 = vmatmul.f32.gmra.mxu0 %v264
  %v328 = vpop.f32.mrf.mxu0
  %v329 = vadd.f32 0.0, %v328
  %330 = vmatmul.f32.gmra.mxu0 %v267
  %v331 = vpop.f32.mrf.mxu0
  %v332 = vadd.f32 0.0, %v331
  %333 = vmatmul.f32.gmra.mxu0 %v270
  %v334 = vpop.f32.mrf.mxu0
  %v335 = vadd.f32 0.0, %v334
  %336 = vmatmul.f32.gmra.mxu0 %v273
  %v337 = vpop.f32.mrf.mxu0
  %v338 = vadd.f32 0.0, %v337
  %339 = vmatmul.f32.gmra.mxu0 %v276
  %v340 = vpop.f32.mrf.mxu0
  %v341 = vadd.f32 0.0, %v340
  %342 = vmatmul.f32.gmra.mxu0 %v279
  %v343 = vpop.f32.mrf.mxu0
  %v344 = vadd.f32 0.0, %v343
  %345 = vmatmul.f32.gmra.mxu0 %v282
  %v346 = vpop.f32.mrf.mxu0
  %v347 = vadd.f32 0.0, %v346
  %348 = vmatmul.f32.gmra.mxu0 %v285
  %v349 = vpop.f32.mrf.mxu0
  %v350 = vadd.f32 0.0, %v349
  %351 = vmatmul.f32.gmra.mxu0 %v288
  %v352 = vpop.f32.mrf.mxu0
  %v353 = vadd.f32 0.0, %v352
  %354 = vmatmul.f32.gmra.mxu0 %v291
  %v355 = vpop.f32.mrf.mxu0
  %v356 = vadd.f32 0.0, %v355
  %357 = vdwg.mxu0
  %358 = vmatpush.msra.mxu0 0.0
  %359 = vmatpush.msra.mxu0 0.0
  %360 = vmatpush.msra.mxu0 0.0
  %361 = vmatpush.msra.mxu0 0.0
  %362 = vmatpush.msra.mxu0 0.0
  %363 = vmatpush.msra.mxu0 0.0
  %364 = vmatpush.msra.mxu0 0.0
  %365 = vmatpush.msra.mxu0 0.0
  %366 = vmatpush.msra.mxu0 0.0
  %367 = vmatpush.msra.mxu0 0.0
  %368 = vmatpush.msra.mxu0 0.0
  %369 = vmatpush.msra.mxu0 0.0
  %370 = vmatpush.msra.mxu0 0.0
  %371 = vmatpush.msra.mxu0 0.0
  %372 = vmatpush.msra.mxu0 0.0
  %373 = vmatpush.msra.mxu0 %v211
  %374 = vmatmul.f32.gmra.mxu0 %v246
  %v375 = vpop.f32.mrf.mxu0
  %v376 = vadd.f32 0.0, %v375
  %377 = vmatmul.f32.gmra.mxu0 %v249
  %v378 = vpop.f32.mrf.mxu0
  %v379 = vadd.f32 0.0, %v378
  %380 = vmatmul.f32.gmra.mxu0 %v252
  %v381 = vpop.f32.mrf.mxu0
  %v382 = vadd.f32 0.0, %v381
  %383 = vmatmul.f32.gmra.mxu0 %v255
  %v384 = vpop.f32.mrf.mxu0
  %v385 = vadd.f32 0.0, %v384
  %386 = vmatmul.f32.gmra.mxu0 %v258
  %v387 = vpop.f32.mrf.mxu0
  %v388 = vadd.f32 0.0, %v387
  %389 = vmatmul.f32.gmra.mxu0 %v261
  %v390 = vpop.f32.mrf.mxu0
  %v391 = vadd.f32 0.0, %v390
  %392 = vmatmul.f32.gmra.mxu0 %v264
  %v393 = vpop.f32.mrf.mxu0
  %v394 = vadd.f32 0.0, %v393
  %395 = vmatmul.f32.gmra.mxu0 %v267
  %v396 = vpop.f32.mrf.mxu0
  %v397 = vadd.f32 0.0, %v396
  %398 = vmatmul.f32.gmra.mxu0 %v270
  %v399 = vpop.f32.mrf.mxu0
  %v400 = vadd.f32 0.0, %v399
  %401 = vmatmul.f32.gmra.mxu0 %v273
  %v402 = vpop.f32.mrf.mxu0
  %v403 = vadd.f32 0.0, %v402
  %404 = vmatmul.f32.gmra.mxu0 %v276
  %v405 = vpop.f32.mrf.mxu0
  %v406 = vadd.f32 0.0, %v405
  %407 = vmatmul.f32.gmra.mxu0 %v279
  %v408 = vpop.f32.mrf.mxu0
  %v409 = vadd.f32 0.0, %v408
  %410 = vmatmul.f32.gmra.mxu0 %v282
  %v411 = vpop.f32.mrf.mxu0
  %v412 = vadd.f32 0.0, %v411
  %413 = vmatmul.f32.gmra.mxu0 %v285
  %v414 = vpop.f32.mrf.mxu0
  %v415 = vadd.f32 0.0, %v414
  %416 = vmatmul.f32.gmra.mxu0 %v288
  %v417 = vpop.f32.mrf.mxu0
  %v418 = vadd.f32 0.0, %v417
  %419 = vmatmul.f32.gmra.mxu0 %v291
  %v420 = vpop.f32.mrf.mxu0
  %v421 = vadd.f32 0.0, %v420
  %422 = vdwg.mxu0
  %v423 = vsub.f32 %v171, %v311
  %v424 = vsub.f32 %v173, %v314
  %v425 = vsub.f32 %v176, %v317
  %v426 = vsub.f32 %v178, %v320
  %v427 = vsub.f32 %v181, %v323
  %v428 = vsub.f32 %v183, %v326
  %v429 = vsub.f32 %v186, %v329
  %v430 = vsub.f32 %v188, %v332
  %v431 = vsub.f32 %v191, %v335
  %v432 = vsub.f32 %v193, %v338
  %v433 = vsub.f32 %v196, %v341
  %v434 = vsub.f32 %v198, %v344
  %v435 = vsub.f32 %v201, %v347
  %v436 = vsub.f32 %v203, %v350
  %v437 = vsub.f32 %v206, %v353
  %v438 = vsub.f32 %v208, %v356
  %v439 = vmul.f32 %v423, %v376
  %v440 = vmul.f32 %v424, %v379
  %v441 = vmul.f32 %v425, %v382
  %v442 = vmul.f32 %v426, %v385
  %v443 = vmul.f32 %v427, %v388
  %v444 = vmul.f32 %v428, %v391
  %v445 = vmul.f32 %v429, %v394
  %v446 = vmul.f32 %v430, %v397
  %v447 = vmul.f32 %v431, %v400
  %v448 = vmul.f32 %v432, %v403
  %v449 = vmul.f32 %v433, %v406
  %v450 = vmul.f32 %v434, %v409
  %v451 = vmul.f32 %v435, %v412
  %v452 = vmul.f32 %v436, %v415
  %v453 = vmul.f32 %v437, %v418
  %v454 = vmul.f32 %v438, %v421
  %v455 = vmax.f32 %v439, 0.0
  %v456 = vmax.f32 %v440, 0.0
  %v457 = vmax.f32 %v441, 0.0
  %v458 = vmax.f32 %v442, 0.0
  %v459 = vmax.f32 %v443, 0.0
  %v460 = vmax.f32 %v444, 0.0
  %v461 = vmax.f32 %v445, 0.0
  %v462 = vmax.f32 %v446, 0.0
  %v463 = vmax.f32 %v447, 0.0
  %v464 = vmax.f32 %v448, 0.0
  %v465 = vmax.f32 %v449, 0.0
  %v466 = vmax.f32 %v450, 0.0
  %v467 = vmax.f32 %v451, 0.0
  %v468 = vmax.f32 %v452, 0.0
  %v469 = vmax.f32 %v453, 0.0
  %v470 = vmax.f32 %v454, 0.0
  %v471 = vpack.c.bf16 %v456, %v455
  %v472 = vpack.c.bf16 %v458, %v457
  %v473 = vpack.c.bf16 %v460, %v459
  %v474 = vpack.c.bf16 %v462, %v461
  %v475 = vpack.c.bf16 %v464, %v463
  %v476 = vpack.c.bf16 %v466, %v465
  %v477 = vpack.c.bf16 %v468, %v467
  %v478 = vpack.c.bf16 %v470, %v469
  %v479 = vld [vmem:[%s5] sm:$0xf]
  %v480 = vld [vmem:[%s5 + $0x4] sm:$0xf]
  %v481 = vld [vmem:[%s5 + $0x8] sm:$0xf]
  %v482 = vld [vmem:[%s5 + $0xc] sm:$0xf]
  %v483 = vld [vmem:[%s5 + $0x10] sm:$0xf]
  %v484 = vld [vmem:[%s5 + $0x14] sm:$0xf]
  %v485 = vld [vmem:[%s5 + $0x18] sm:$0xf]
  %v486 = vld [vmem:[%s5 + $0x1c] sm:$0xf]
  %v487 = vld [vmem:[%s5 + $0x20] sm:$0xf]
  %v488 = vld [vmem:[%s5 + $0x24] sm:$0xf]
  %v489 = vld [vmem:[%s5 + $0x28] sm:$0xf]
  %v490 = vld [vmem:[%s5 + $0x2c] sm:$0xf]
  %v491 = vld [vmem:[%s5 + $0x30] sm:$0xf]
  %v492 = vld [vmem:[%s5 + $0x34] sm:$0xf]
  %v493 = vld [vmem:[%s5 + $0x38] sm:$0xf]
  %v494 = vld [vmem:[%s5 + $0x3c] sm:$0xf]
  %v495 = vld [vmem:[%s6] sm:$0x1]
  %v497 = vperm.slane %v495, 0
  %v515 = vunpack.c.l.b16 %v479
  %v516 = vunpack.c.l.b16 %v480
  %v517 = vunpack.c.l.b16 %v481
  %v518 = vunpack.c.l.b16 %v482
  %v519 = vunpack.c.l.b16 %v483
  %v520 = vunpack.c.l.b16 %v484
  %v521 = vunpack.c.l.b16 %v485
  %v522 = vunpack.c.l.b16 %v486
  %v523 = vunpack.c.l.b16 %v487
  %v524 = vunpack.c.l.b16 %v488
  %v525 = vunpack.c.l.b16 %v489
  %v526 = vunpack.c.l.b16 %v490
  %v527 = vunpack.c.l.b16 %v491
  %v528 = vunpack.c.l.b16 %v492
  %v529 = vunpack.c.l.b16 %v493
  %v530 = vunpack.c.l.b16 %v494
  %v531 = vpack.c.b16 %v516, %v515
  %v532 = vpack.c.b16 %v518, %v517
  %v533 = vpack.c.b16 %v520, %v519
  %v534 = vpack.c.b16 %v522, %v521
  %v535 = vpack.c.b16 %v524, %v523
  %v536 = vpack.c.b16 %v526, %v525
  %v537 = vpack.c.b16 %v528, %v527
  %v538 = vpack.c.b16 %v530, %v529
  %547 = vmatpush.bf16.msra.mxu0 %v538
  %548 = vmatpush.bf16.msra.mxu0 %v537
  %549 = vmatpush.bf16.msra.mxu0 %v536
  %550 = vmatpush.bf16.msra.mxu0 %v535
  %551 = vmatpush.bf16.msra.mxu0 %v534
  %552 = vmatpush.bf16.msra.mxu0 %v533
  %553 = vmatpush.bf16.msra.mxu0 %v532
  %554 = vmatpush.bf16.msra.mxu0 %v531
  %555 = vmatmul.bf16.gmra.mxu0 %v471
  %v556 = vpop.f32.mrf.mxu0
  %v557 = vadd.f32 %v497, %v556
  %v558 = vpop.f32.mrf.mxu0
  %v559 = vadd.f32 %v497, %v558
  %560 = vmatmul.bf16.gmra.mxu0 %v472
  %v561 = vpop.f32.mrf.mxu0
  %v562 = vadd.f32 %v497, %v561
  %v563 = vpop.f32.mrf.mxu0
  %v564 = vadd.f32 %v497, %v563
  %565 = vmatmul.bf16.gmra.mxu0 %v473
  %v566 = vpop.f32.mrf.mxu0
  %v567 = vadd.f32 %v497, %v566
  %v568 = vpop.f32.mrf.mxu0
  %v569 = vadd.f32 %v497, %v568
  %570 = vmatmul.bf16.gmra.mxu0 %v474
  %v571 = vpop.f32.mrf.mxu0
  %v572 = vadd.f32 %v497, %v571
  %v573 = vpop.f32.mrf.mxu0
  %v574 = vadd.f32 %v497, %v573
  %575 = vmatmul.bf16.gmra.mxu0 %v475
  %v576 = vpop.f32.mrf.mxu0
  %v577 = vadd.f32 %v497, %v576
  %v578 = vpop.f32.mrf.mxu0
  %v579 = vadd.f32 %v497, %v578
  %580 = vmatmul.bf16.gmra.mxu0 %v476
  %v581 = vpop.f32.mrf.mxu0
  %v582 = vadd.f32 %v497, %v581
  %v583 = vpop.f32.mrf.mxu0
  %v584 = vadd.f32 %v497, %v583
  %585 = vmatmul.bf16.gmra.mxu0 %v477
  %v586 = vpop.f32.mrf.mxu0
  %v587 = vadd.f32 %v497, %v586
  %v588 = vpop.f32.mrf.mxu0
  %v589 = vadd.f32 %v497, %v588
  %590 = vmatmul.bf16.gmra.mxu0 %v478
  %v591 = vpop.f32.mrf.mxu0
  %v592 = vadd.f32 %v497, %v591
  %v593 = vpop.f32.mrf.mxu0
  %v594 = vadd.f32 %v497, %v593
  %595 = vdwg.mxu0
  %v596 = vld [vmem:[%s7] sm:$0xff]
  %v597 = vld [vmem:[%s7 + $0x8] sm:$0xff]
  %598 = vmatpush.msra.mxu0 0.0
  %599 = vmatpush.msra.mxu0 0.0
  %600 = vmatpush.msra.mxu0 0.0
  %601 = vmatpush.msra.mxu0 0.0
  %602 = vmatpush.msra.mxu0 0.0
  %603 = vmatpush.msra.mxu0 0.0
  %604 = vmatpush.msra.mxu0 0.0
  %605 = vmatpush.msra.mxu0 0.0
  %606 = vmatpush.msra.mxu0 0.0
  %607 = vmatpush.msra.mxu0 0.0
  %608 = vmatpush.msra.mxu0 0.0
  %609 = vmatpush.msra.mxu0 0.0
  %610 = vmatpush.msra.mxu0 0.0
  %611 = vmatpush.msra.mxu0 0.0
  %612 = vmatpush.msra.mxu0 0.0
  %613 = vmatpush.msra.mxu0 %v596
  %614 = vmatmul.f32.gmra.mxu0 %v246
  %v615 = vpop.f32.mrf.mxu0
  %v616 = vadd.f32 0.0, %v615
  %617 = vmatmul.f32.gmra.mxu0 %v249
  %v618 = vpop.f32.mrf.mxu0
  %v619 = vadd.f32 0.0, %v618
  %620 = vmatmul.f32.gmra.mxu0 %v252
  %v621 = vpop.f32.mrf.mxu0
  %v622 = vadd.f32 0.0, %v621
  %623 = vmatmul.f32.gmra.mxu0 %v255
  %v624 = vpop.f32.mrf.mxu0
  %v625 = vadd.f32 0.0, %v624
  %626 = vmatmul.f32.gmra.mxu0 %v258
  %v627 = vpop.f32.mrf.mxu0
  %v628 = vadd.f32 0.0, %v627
  %629 = vmatmul.f32.gmra.mxu0 %v261
  %v630 = vpop.f32.mrf.mxu0
  %v631 = vadd.f32 0.0, %v630
  %632 = vmatmul.f32.gmra.mxu0 %v264
  %v633 = vpop.f32.mrf.mxu0
  %v634 = vadd.f32 0.0, %v633
  %635 = vmatmul.f32.gmra.mxu0 %v267
  %v636 = vpop.f32.mrf.mxu0
  %v637 = vadd.f32 0.0, %v636
  %638 = vmatmul.f32.gmra.mxu0 %v270
  %v639 = vpop.f32.mrf.mxu0
  %v640 = vadd.f32 0.0, %v639
  %641 = vmatmul.f32.gmra.mxu0 %v273
  %v642 = vpop.f32.mrf.mxu0
  %v643 = vadd.f32 0.0, %v642
  %644 = vmatmul.f32.gmra.mxu0 %v276
  %v645 = vpop.f32.mrf.mxu0
  %v646 = vadd.f32 0.0, %v645
  %647 = vmatmul.f32.gmra.mxu0 %v279
  %v648 = vpop.f32.mrf.mxu0
  %v649 = vadd.f32 0.0, %v648
  %650 = vmatmul.f32.gmra.mxu0 %v282
  %v651 = vpop.f32.mrf.mxu0
  %v652 = vadd.f32 0.0, %v651
  %653 = vmatmul.f32.gmra.mxu0 %v285
  %v654 = vpop.f32.mrf.mxu0
  %v655 = vadd.f32 0.0, %v654
  %656 = vmatmul.f32.gmra.mxu0 %v288
  %v657 = vpop.f32.mrf.mxu0
  %v658 = vadd.f32 0.0, %v657
  %659 = vmatmul.f32.gmra.mxu0 %v291
  %v660 = vpop.f32.mrf.mxu0
  %v661 = vadd.f32 0.0, %v660
  %662 = vdwg.mxu0
  %663 = vmatpush.msra.mxu0 0.0
  %664 = vmatpush.msra.mxu0 0.0
  %665 = vmatpush.msra.mxu0 0.0
  %666 = vmatpush.msra.mxu0 0.0
  %667 = vmatpush.msra.mxu0 0.0
  %668 = vmatpush.msra.mxu0 0.0
  %669 = vmatpush.msra.mxu0 0.0
  %670 = vmatpush.msra.mxu0 0.0
  %671 = vmatpush.msra.mxu0 0.0
  %672 = vmatpush.msra.mxu0 0.0
  %673 = vmatpush.msra.mxu0 0.0
  %674 = vmatpush.msra.mxu0 0.0
  %675 = vmatpush.msra.mxu0 0.0
  %676 = vmatpush.msra.mxu0 0.0
  %677 = vmatpush.msra.mxu0 0.0
  %678 = vmatpush.msra.mxu0 %v597
  %679 = vmatmul.f32.gmra.mxu0 %v246
  %v680 = vpop.f32.mrf.mxu0
  %v681 = vadd.f32 0.0, %v680
  %682 = vmatmul.f32.gmra.mxu0 %v249
  %v683 = vpop.f32.mrf.mxu0
  %v684 = vadd.f32 0.0, %v683
  %685 = vmatmul.f32.gmra.mxu0 %v252
  %v686 = vpop.f32.mrf.mxu0
  %v687 = vadd.f32 0.0, %v686
  %688 = vmatmul.f32.gmra.mxu0 %v255
  %v689 = vpop.f32.mrf.mxu0
  %v690 = vadd.f32 0.0, %v689
  %691 = vmatmul.f32.gmra.mxu0 %v258
  %v692 = vpop.f32.mrf.mxu0
  %v693 = vadd.f32 0.0, %v692
  %694 = vmatmul.f32.gmra.mxu0 %v261
  %v695 = vpop.f32.mrf.mxu0
  %v696 = vadd.f32 0.0, %v695
  %697 = vmatmul.f32.gmra.mxu0 %v264
  %v698 = vpop.f32.mrf.mxu0
  %v699 = vadd.f32 0.0, %v698
  %700 = vmatmul.f32.gmra.mxu0 %v267
  %v701 = vpop.f32.mrf.mxu0
  %v702 = vadd.f32 0.0, %v701
  %703 = vmatmul.f32.gmra.mxu0 %v270
  %v704 = vpop.f32.mrf.mxu0
  %v705 = vadd.f32 0.0, %v704
  %706 = vmatmul.f32.gmra.mxu0 %v273
  %v707 = vpop.f32.mrf.mxu0
  %v708 = vadd.f32 0.0, %v707
  %709 = vmatmul.f32.gmra.mxu0 %v276
  %v710 = vpop.f32.mrf.mxu0
  %v711 = vadd.f32 0.0, %v710
  %712 = vmatmul.f32.gmra.mxu0 %v279
  %v713 = vpop.f32.mrf.mxu0
  %v714 = vadd.f32 0.0, %v713
  %715 = vmatmul.f32.gmra.mxu0 %v282
  %v716 = vpop.f32.mrf.mxu0
  %v717 = vadd.f32 0.0, %v716
  %718 = vmatmul.f32.gmra.mxu0 %v285
  %v719 = vpop.f32.mrf.mxu0
  %v720 = vadd.f32 0.0, %v719
  %721 = vmatmul.f32.gmra.mxu0 %v288
  %v722 = vpop.f32.mrf.mxu0
  %v723 = vadd.f32 0.0, %v722
  %724 = vmatmul.f32.gmra.mxu0 %v291
  %v725 = vpop.f32.mrf.mxu0
  %v726 = vadd.f32 0.0, %v725
  %727 = vdwg.mxu0
  %v728 = vsub.f32 %v557, %v616
  %v729 = vsub.f32 %v559, %v619
  %v730 = vsub.f32 %v562, %v622
  %v731 = vsub.f32 %v564, %v625
  %v732 = vsub.f32 %v567, %v628
  %v733 = vsub.f32 %v569, %v631
  %v734 = vsub.f32 %v572, %v634
  %v735 = vsub.f32 %v574, %v637
  %v736 = vsub.f32 %v577, %v640
  %v737 = vsub.f32 %v579, %v643
  %v738 = vsub.f32 %v582, %v646
  %v739 = vsub.f32 %v584, %v649
  %v740 = vsub.f32 %v587, %v652
  %v741 = vsub.f32 %v589, %v655
  %v742 = vsub.f32 %v592, %v658
  %v743 = vsub.f32 %v594, %v661
  %v744 = vmul.f32 %v728, %v681
  %v745 = vmul.f32 %v729, %v684
  %v746 = vmul.f32 %v730, %v687
  %v747 = vmul.f32 %v731, %v690
  %v748 = vmul.f32 %v732, %v693
  %v749 = vmul.f32 %v733, %v696
  %v750 = vmul.f32 %v734, %v699
  %v751 = vmul.f32 %v735, %v702
  %v752 = vmul.f32 %v736, %v705
  %v753 = vmul.f32 %v737, %v708
  %v754 = vmul.f32 %v738, %v711
  %v755 = vmul.f32 %v739, %v714
  %v756 = vmul.f32 %v740, %v717
  %v757 = vmul.f32 %v741, %v720
  %v758 = vmul.f32 %v742, %v723
  %v759 = vmul.f32 %v743, %v726
  %v760 = vmax.f32 %v744, 0.0
  %v761 = vmax.f32 %v745, 0.0
  %v762 = vmax.f32 %v746, 0.0
  %v763 = vmax.f32 %v747, 0.0
  %v764 = vmax.f32 %v748, 0.0
  %v765 = vmax.f32 %v749, 0.0
  %v766 = vmax.f32 %v750, 0.0
  %v767 = vmax.f32 %v751, 0.0
  %v768 = vmax.f32 %v752, 0.0
  %v769 = vmax.f32 %v753, 0.0
  %v770 = vmax.f32 %v754, 0.0
  %v771 = vmax.f32 %v755, 0.0
  %v772 = vmax.f32 %v756, 0.0
  %v773 = vmax.f32 %v757, 0.0
  %v774 = vmax.f32 %v758, 0.0
  %v775 = vmax.f32 %v759, 0.0
  %v776 = vld [vmem:[%s8] sm:$0x1]
  %s777 = sld [smem:[#allocation2]]
  %v778 = vstv %s777
  %779 = vmatpush.xpose.msra.mxu0 %v775
  %780 = vmatpush.xpose.msra.mxu0 %v774
  %781 = vmatpush.xpose.msra.mxu0 %v773
  %782 = vmatpush.xpose.msra.mxu0 %v772
  %783 = vmatpush.xpose.msra.mxu0 %v771
  %784 = vmatpush.xpose.msra.mxu0 %v770
  %785 = vmatpush.xpose.msra.mxu0 %v769
  %786 = vmatpush.xpose.msra.mxu0 %v768
  %787 = vmatpush.xpose.msra.mxu0 %v767
  %788 = vmatpush.xpose.msra.mxu0 %v766
  %789 = vmatpush.xpose.msra.mxu0 %v765
  %790 = vmatpush.xpose.msra.mxu0 %v764
  %791 = vmatpush.xpose.msra.mxu0 %v763
  %792 = vmatpush.xpose.msra.mxu0 %v762
  %793 = vmatpush.xpose.msra.mxu0 %v761
  %794 = vmatpush.xpose.msra.mxu0 %v760
  %795 = vmatmul.f32.gmra.mxu0 %v776
  %v796 = vpop.f32.mrf.mxu0
  %v797 = vadd.f32 %v778, %v796
  %798 = vdwg.mxu0
  %799 = vst [vmem:[%s10] sm:$0x1] %v797
  // Predicated region
  $region42: #{_forward_impl.5} parent=0 // pred_check
    _
  $region43: #{_forward_impl.5} parent=0 // pred_check_branch
    %801 = sbr.rel (0) target = $region45
  $region44: #{_forward_impl.5} parent=0 // pred_region
    _
  $region45: #{_forward_impl.5} parent=0 // pred_fallthru
    _
  // Predicated region
  $region46: #{_forward_impl.5} parent=0 // pred_check
    _
  $region47: #{_forward_impl.5} parent=0 // pred_check_branch
    %803 = sbr.rel (0) target = $region49
  $region48: #{_forward_impl.5} parent=0 // pred_region
    _
  $region49: #{_forward_impl.5} parent=0 // pred_fallthru
    _

</llo_original>
